<compile_context>
chip_gen: v7x
topology: tpu7x:2x2x1
jax: 0.10.0
libtpu: 0.0.40
codegen_flags: <defaults>
</compile_context>

<pallas_src>
import math
from functools import partial
from typing import NamedTuple

import jax
import jax.numpy as jnp
from jax.experimental import pallas as pl
from jax.experimental.pallas import tpu as pltpu


def _round_up(x, m):
    return ((x + m - 1) // m) * m


def _cdiv(a, b):
    return (a + b - 1) // b


def _tpu_vmem_capacity_bytes():
    try:
        return int(pltpu.get_tpu_info().vmem_capacity_bytes)
    except Exception:
        return 64 * 1024 * 1024   # conservative fallback (v7x per-TC size)


class MDLSTMMeta(NamedTuple):
    """Static (hashable) metadata produced by prepack_params."""
    input_size: int
    hidden_size: int
    hidden_pad: int     # per-gate column width, multiple of 128
    h_tile: int         # hidden-axis lane tile (multiple of 128, divides hidden_pad)


def _fast_sigmoid(x):
    # sigmoid(x) == 0.5 * (tanh(x / 2) + 1): one EUP pass instead of exp + divide.
    return 0.5 * jnp.tanh(0.5 * x) + 0.5


# -----------------------------------------------------------------------------
# Kernel
# -----------------------------------------------------------------------------
def _mdlstm_cell_kernel(x1_ref, x2_ref, h1_ref, h2_ref, c1_ref, c2_ref,
                        wx1_ref, wx2_ref, wh1_ref, wh2_ref, b_ref,
                        next_h_ref, next_c_ref):
    tn = next_c_ref.shape[-1]

    # Four accumulating MXU matmuls against the row-blocks of the packed
    # weight (replaces a wrapper-side HBM concat of [x1|x2|h1|h2]).
    g = jnp.dot(x1_ref[...], wx1_ref[...], preferred_element_type=jnp.float32)
    g = g + jnp.dot(x2_ref[...], wx2_ref[...], preferred_element_type=jnp.float32)
    g = g + jnp.dot(h1_ref[...], wh1_ref[...], preferred_element_type=jnp.float32)
    g = g + jnp.dot(h2_ref[...], wh2_ref[...], preferred_element_type=jnp.float32)
    g = g + b_ref[...].astype(jnp.float32)

    # Gate-interleaved column layout [in | cell | out | fg1 | fg2], each tn
    # lanes wide (tn % 128 == 0) -> all slices are lane-dense static views.
    ingate   = _fast_sigmoid(g[:, 0 * tn:1 * tn])
    cellgate = jnp.tanh(g[:, 1 * tn:2 * tn])
    outgate  = _fast_sigmoid(g[:, 2 * tn:3 * tn])
    fg1      = _fast_sigmoid(g[:, 3 * tn:4 * tn])
    fg2      = _fast_sigmoid(g[:, 4 * tn:5 * tn])

    c1 = c1_ref[...].astype(jnp.float32)
    c2 = c2_ref[...].astype(jnp.float32)

    next_c = fg1 * c1 + fg2 * c2 + ingate * cellgate
    next_h = outgate * jnp.tanh(next_c)

    next_c_ref[...] = next_c.astype(next_c_ref.dtype)   # f32 carried state
    next_h_ref[...] = next_h.astype(next_h_ref.dtype)


# -----------------------------------------------------------------------------
# One-time parameter pre-packing (hoisted out of the per-step forward)
# -----------------------------------------------------------------------------
def prepack_params(params, input_size, hidden_size, *,
                   compute_dtype=jnp.float32, h_tile=None,
                   resident_weight_budget_bytes=None):
    """Pack weight_H / weight_f1 / weight_f2 / biases once.

    Column layout (per hidden tile of width `h_tile`, gate-interleaved):
        [ingate | cellgate | outgate | fg1 | fg2]   each `h_tile` lanes wide
    Row blocks are kept as four separate matrices so the kernel consumes
    x1 / x2 / h1 / h2 directly (no wrapper concat):
        w_x1 (I, 5*Hp)  w_x2 (I, 5*Hp)  w_h1 (H, 5*Hp)  w_h2 (H, 5*Hp)
    with Hp = round_up(H, 128).  Weights are stored directly in
    `compute_dtype` (bf16 recommended on v5e/v6e/v7x); bias stays f32.
    Returns (packed_arrays, MDLSTMMeta).
    """
    I, H = int(input_size), int(hidden_size)
    Hp = _round_up(H, 128)
    w_itemsize = jnp.dtype(compute_dtype).itemsize

    # Pick the hidden-axis tile: largest multiple of 128 dividing Hp whose
    # double-buffered weight chunk fits the resident budget.  h_tile == Hp
    # keeps the whole packed weight VMEM-resident across batch tiles.
    if resident_weight_budget_bytes is None:
        resident_weight_budget_bytes = int(0.4 * _tpu_vmem_capacity_bytes())
    if h_tile is None:
        n128 = Hp // 128
        candidates = sorted({128 * d for d in range(1, n128 + 1) if n128 % d == 0},
                            reverse=True)
        h_tile = 128
        for cand in candidates:
            if (2 * I + 2 * H) * 5 * cand * w_itemsize * 2 <= resident_weight_budget_bytes:
                h_tile = cand
                break
    h_tile = int(h_tile)
    if Hp % h_tile != 0 or h_tile % 128 != 0:
        raise ValueError(f"h_tile={h_tile} must be a multiple of 128 dividing {Hp}")
    n_tiles = Hp // h_tile

    wH = jnp.asarray(params["weight_H"], jnp.float32)    # (3H, 2I+2H)
    wf1 = jnp.asarray(params["weight_f1"], jnp.float32)  # (H, I+H)
    wf2 = jnp.asarray(params["weight_f2"], jnp.float32)  # (H, I+H)

    def _bias(name, n):
        b = params.get(name)
        return jnp.zeros((n,), jnp.float32) if b is None else jnp.asarray(b, jnp.float32)

    def _pack(rows, gate_srcs):
        # gate_srcs: {gate_idx: (rows, H)} already in (in, out) orientation.
        out = jnp.zeros((rows, n_tiles, 5, h_tile), jnp.float32)
        for g_idx, src in gate_srcs.items():
            src_p = jnp.zeros((rows, Hp), jnp.float32).at[:, :H].set(src)
            out = out.at[:, :, g_idx, :].set(src_p.reshape(rows, n_tiles, h_tile))
        return out.reshape(rows, n_tiles * 5 * h_tile)

    # weight_H rows: [0:H]=ingate, [H:2H]=cellgate, [2H:3H]=outgate
    # weight_H cols: [0:I]=x1, [I:2I]=x2, [2I:2I+H]=h1, [2I+H:2I+2H]=h2
    # weight_f1 cols: [0:I]=x1, [I:I+H]=h1 ; weight_f2 cols: [0:I]=x2, [I:I+H]=h2
    w_x1 = _pack(I, {0: wH[0:H, 0:I].T, 1: wH[H:2 * H, 0:I].T,
                     2: wH[2 * H:3 * H, 0:I].T, 3: wf1[:, 0:I].T})
    w_x2 = _pack(I, {0: wH[0:H, I:2 * I].T, 1: wH[H:2 * H, I:2 * I].T,
                     2: wH[2 * H:3 * H, I:2 * I].T, 4: wf2[:, 0:I].T})
    w_h1 = _pack(H, {0: wH[0:H, 2 * I:2 * I + H].T,
                     1: wH[H:2 * H, 2 * I:2 * I + H].T,
                     2: wH[2 * H:3 * H, 2 * I:2 * I + H].T,
                     3: wf1[:, I:I + H].T})
    w_h2 = _pack(H, {0: wH[0:H, 2 * I + H:2 * I + 2 * H].T,
                     1: wH[H:2 * H, 2 * I + H:2 * I + 2 * H].T,
                     2: wH[2 * H:3 * H, 2 * I + H:2 * I + 2 * H].T,
                     4: wf2[:, I:I + H].T})

    bH = _bias("bias_H", 3 * H)
    bias = _pack(1, {0: bH[0:H].reshape(1, H),
                     1: bH[H:2 * H].reshape(1, H),
                     2: bH[2 * H:3 * H].reshape(1, H),
                     3: _bias("bias_f1", H).reshape(1, H),
                     4: _bias("bias_f2", H).reshape(1, H)})

    packed = {
        "w_x1": w_x1.astype(compute_dtype), "w_x2": w_x2.astype(compute_dtype),
        "w_h1": w_h1.astype(compute_dtype), "w_h2": w_h2.astype(compute_dtype),
        "bias": bias,   # f32
    }
    meta = MDLSTMMeta(input_size=I, hidden_size=H, hidden_pad=Hp, h_tile=h_tile)
    return packed, meta


def _pick_batch_tile(batch, max_tile):
    """Smallest multiple-of-8 tile that covers `batch` in cdiv(batch, max_tile)
    steps -> minimal zero-padding (e.g. B=300 -> tb=152, not 512)."""
    max_tile = max(8, (max_tile // 8) * 8)
    if batch <= max_tile:
        return _round_up(max(batch, 1), 8)
    n = _cdiv(batch, max_tile)
    return _round_up(_cdiv(batch, n), 8)


# -----------------------------------------------------------------------------
# Forward wrapper
# -----------------------------------------------------------------------------
@partial(jax.jit, static_argnames=("meta", "out_h_dtype"))
def mdlstm_cell_forward(packed, input1, input2, hx1, hx2, *, meta,
                        out_h_dtype=None):
    """Pallas-backed MDLSTMCell.forward -> (output, (next_h, next_c)).

    The MXU is fed in the dtype chosen at `prepack_params` time (bf16 is
    recommended on v5e/v6e/v7x: the MXU is bf16-native and it halves weight
    VMEM/DMA); accumulation and the elementwise tail always run in f32 and the
    carried cell state `next_c` is always emitted in f32.  Pass
    `out_h_dtype=jnp.bfloat16` if downstream consumers accept a bf16 hidden
    state (halves next_h writeback and the next step's h reads).
    """
    h1, c1 = hx1
    h2, c2 = hx2
    B, I = input1.shape
    H, Hp, tn = meta.hidden_size, meta.hidden_pad, meta.h_tile
    if I != meta.input_size or h1.shape[1] != H or c1.shape[1] != H:
        raise ValueError("input/hidden sizes do not match the prepacked params")

    w_dtype = packed["w_x1"].dtype
    out_h_dtype = jnp.dtype(input1.dtype if out_h_dtype is None else out_h_dtype)

    # Cast MXU operands once (weights are already stored in w_dtype).
    x1 = input1.astype(w_dtype)
    x2 = input2.astype(w_dtype)
    h1c = h1.astype(w_dtype)
    h2c = h2.astype(w_dtype)

    # ---- tile selection from the actual VMEM capacity ----------------------
    vmem_cap = _tpu_vmem_capacity_bytes()
    usable = int(0.85 * vmem_cap)              # headroom for compiler scratch
    K = 2 * I + 2 * H
    w_itemsize = jnp.dtype(w_dtype).itemsize
    c_itemsize = jnp.dtype(c1.dtype).itemsize
    wchunk = K * 5 * tn * w_itemsize + 5 * tn * 4          # one weight+bias column chunk
    row_bytes = (K * w_itemsize + 2 * tn * c_itemsize
                 + tn * (out_h_dtype.itemsize + 4))          # per batch row, per chunk
    target = 512 if vmem_cap >= (96 << 20) else 256           # bigger tiles on v5e/v6e
    tb_fit = (usable - 2 * wchunk) // max(2 * row_bytes, 1)
    if tb_fit >= 8:
        target = max(8, min(target, (tb_fit // 8) * 8))
    tb = _pick_batch_tile(B, target)
    B_pad = _round_up(B, tb)

    def _pad2(a, rows, cols):
        if a.shape == (rows, cols):
            return a
        return jnp.pad(a, ((0, rows - a.shape[0]), (0, cols - a.shape[1])))

    x1 = _pad2(x1, B_pad, I)
    x2 = _pad2(x2, B_pad, I)
    h1c = _pad2(h1c, B_pad, H)
    h2c = _pad2(h2c, B_pad, H)
    c1p = _pad2(c1, B_pad, Hp)   # lane-pad cell state to Hp (no-op when H % 128 == 0)
    c2p = _pad2(c2, B_pad, Hp)

    n_j = Hp // tn       # hidden tiles: OUTER grid axis -> each weight chunk DMA'd once
    n_b = B_pad // tb    # batch tiles:  inner grid axis
    grid = (n_j, n_b)

    vmem_est = 2 * wchunk + 2 * tb * row_bytes + (1 << 20)
    vmem_limit = int(min(max(int(1.3 * vmem_est), 32 << 20), usable))

    next_h, next_c = pl.pallas_call(
        _mdlstm_cell_kernel,
        out_shape=(
            jax.ShapeDtypeStruct((B_pad, Hp), out_h_dtype),   # next_h
            jax.ShapeDtypeStruct((B_pad, Hp), jnp.float32),   # next_c (f32 carry)
        ),
        grid=grid,
        in_specs=[
            pl.BlockSpec((tb, I), lambda j, i: (i, 0)),        # x1
            pl.BlockSpec((tb, I), lambda j, i: (i, 0)),        # x2
            pl.BlockSpec((tb, H), lambda j, i: (i, 0)),        # h1
            pl.BlockSpec((tb, H), lambda j, i: (i, 0)),        # h2
            pl.BlockSpec((tb, tn), lambda j, i: (i, j)),       # c1 tile
            pl.BlockSpec((tb, tn), lambda j, i: (i, j)),       # c2 tile
            pl.BlockSpec((I, 5 * tn), lambda j, i: (0, j)),    # w_x1 chunk (resident if n_j==1)
            pl.BlockSpec((I, 5 * tn), lambda j, i: (0, j)),    # w_x2 chunk
            pl.BlockSpec((H, 5 * tn), lambda j, i: (0, j)),    # w_h1 chunk
            pl.BlockSpec((H, 5 * tn), lambda j, i: (0, j)),    # w_h2 chunk
            pl.BlockSpec((1, 5 * tn), lambda j, i: (0, j)),    # bias chunk
        ],
        out_specs=(
            pl.BlockSpec((tb, tn), lambda j, i: (i, j)),
            pl.BlockSpec((tb, tn), lambda j, i: (i, j)),
        ),
        compiler_params=pltpu.CompilerParams(
            dimension_semantics=("parallel", "parallel"),   # megacore sharding on v7x
            vmem_limit_bytes=vmem_limit,
        ),
    )(x1, x2, h1c, h2c, c1p, c2p,
      packed["w_x1"], packed["w_x2"], packed["w_h1"], packed["w_h2"],
      packed["bias"])

    if (B_pad, Hp) != (B, H):
        next_h = next_h[:B, :H]
        next_c = next_c[:B, :H]
    output = next_h
    return output, (next_h, next_c)


# -----------------------------------------------------------------------------
# Init + pure-JAX reference (for verification)
# -----------------------------------------------------------------------------
def init_params(key, input_size, hidden_size):
    """Deterministic parameter init matching MDLSTMCell.reset_parameters."""
    stdv = 1.0 / math.sqrt(hidden_size)
    keys = jax.random.split(key, 6)
    u = lambda k, shape: jax.random.uniform(
        k, shape, dtype=jnp.float32, minval=-stdv, maxval=stdv)
    return {
        "weight_f1": u(keys[0], (hidden_size, input_size + hidden_size)),
        "weight_f2": u(keys[1], (hidden_size, input_size + hidden_size)),
        "weight_H": u(keys[2], (3 * hidden_size, 2 * input_size + 2 * hidden_size)),
        "bias_f1": u(keys[3], (hidden_size,)),
        "bias_f2": u(keys[4], (hidden_size,)),
        "bias_H": u(keys[5], (3 * hidden_size,)),
    }


def reference_forward(params, input1, input2, hx1, hx2):
    """Pure-JAX reference mirroring the PyTorch forward."""
    h1, c1 = hx1
    h2, c2 = hx2
    Hcat = jnp.concatenate([input1, input2, h1, h2], axis=1)
    gates = Hcat @ params["weight_H"].T + params["bias_H"]
    hd = h1.shape[1]
    ingate = jax.nn.sigmoid(gates[:, :hd])
    cellgate = jnp.tanh(gates[:, hd:2 * hd])
    outgate = jax.nn.sigmoid(gates[:, 2 * hd:])
    fg1 = jax.nn.sigmoid(
        jnp.concatenate([input1, h1], axis=1) @ params["weight_f1"].T + params["bias_f1"])
    fg2 = jax.nn.sigmoid(
        jnp.concatenate([input2, h2], axis=1) @ params["weight_f2"].T + params["bias_f2"])
    next_c = fg1 * c1 + fg2 * c2 + ingate * cellgate
    next_h = outgate * jnp.tanh(next_c)
    return next_h, (next_h, next_c)


# -----------------------------------------------------------------------------
# Demo / correctness check
# -----------------------------------------------------------------------------
if __name__ == "__main__":
    root_key = jax.random.PRNGKey(0)

    def run_case(B, I, H, compute_dtype, atol, h_tile=None):
        k = jax.random.fold_in(root_key, B * 1000003 + I * 1009 + H)
        kp, k1, k2, k3, k4, k5, k6 = jax.random.split(k, 7)
        params = init_params(kp, I, H)
        packed, meta = prepack_params(params, I, H,
                                      compute_dtype=compute_dtype, h_tile=h_tile)

        x1 = jax.random.normal(k1, (B, I), dtype=jnp.float32)
        x2 = jax.random.normal(k2, (B, I), dtype=jnp.float32)
        hx1 = (jax.random.normal(k3, (B, H), dtype=jnp.float32),
               jax.random.normal(k4, (B, H), dtype=jnp.float32))
        hx2 = (jax.random.normal(k5, (B, H), dtype=jnp.float32),
               jax.random.normal(k6, (B, H), dtype=jnp.float32))

        out, (nh, nc) = mdlstm_cell_forward(packed, x1, x2, hx1, hx2, meta=meta)
        jax.block_until_ready((out, nh, nc))

        ref_out, (ref_h, ref_c) = reference_forward(params, x1, x2, hx1, hx2)
        assert out.shape == (B, H) and nc.shape == (B, H)
        assert jnp.allclose(out.astype(jnp.float32), ref_out, atol=atol, rtol=atol), (
            f"next_h mismatch (B={B}, I={I}, H={H}, dtype={compute_dtype})")
        assert jnp.allclose(nc, ref_c, atol=atol, rtol=atol), (
            f"next_c mismatch (B={B}, I={I}, H={H}, dtype={compute_dtype})")

    # f32, small shapes consistent with the module (single resident weight tile).
    run_case(B=8, I=32, H=32, compute_dtype=jnp.float32, atol=1e-4)
    # Non-multiple-of-8 batch + non-multiple-of-128 H + forced hidden tiling
    # (h_tile=128 over Hp=256) exercises padding, lane-pad and the N-tiled path.
    run_case(B=12, I=48, H=160, compute_dtype=jnp.float32, atol=1e-4, h_tile=128)
    # bf16-feed-the-MXU path (recommended on v5e/v6e/v7x); f32 tail + f32 next_c.
    run_case(B=8, I=32, H=32, compute_dtype=jnp.bfloat16, atol=5e-2)

    print("KERNEL_OK")
</pallas_src>

<mosaic_0001>
module attributes {stable_mosaic.version = 11 : i64} {
  func.func @_mdlstm_cell_kernel(%arg0: i32, %arg1: i32, %arg2: memref<8x32xf32, #tpu.memory_space<vmem>>, %arg3: memref<8x32xf32, #tpu.memory_space<vmem>>, %arg4: memref<8x32xf32, #tpu.memory_space<vmem>>, %arg5: memref<8x32xf32, #tpu.memory_space<vmem>>, %arg6: memref<8x128xf32, #tpu.memory_space<vmem>>, %arg7: memref<8x128xf32, #tpu.memory_space<vmem>>, %arg8: memref<32x640xf32, #tpu.memory_space<vmem>>, %arg9: memref<32x640xf32, #tpu.memory_space<vmem>>, %arg10: memref<32x640xf32, #tpu.memory_space<vmem>>, %arg11: memref<32x640xf32, #tpu.memory_space<vmem>>, %arg12: memref<1x640xf32, #tpu.memory_space<vmem>>, %arg13: memref<8x128xf32, #tpu.memory_space<vmem>>, %arg14: memref<8x128xf32, #tpu.memory_space<vmem>>) attributes {dimension_semantics = [#tpu.dimension_semantics<parallel>, #tpu.dimension_semantics<parallel>], iteration_bounds = array<i64: 1, 1>, scalar_prefetch = 0 : i64, scratch_operands = 0 : i64, tpu.core_type = #tpu.core_type<tc>, window_params = [{transform_indices = @transform_0, window_bounds = array<i64: 8, 32>}, {transform_indices = @transform_1, window_bounds = array<i64: 8, 32>}, {transform_indices = @transform_2, window_bounds = array<i64: 8, 32>}, {transform_indices = @transform_3, window_bounds = array<i64: 8, 32>}, {transform_indices = @transform_4, window_bounds = array<i64: 8, 128>}, {transform_indices = @transform_5, window_bounds = array<i64: 8, 128>}, {transform_indices = @transform_6, window_bounds = array<i64: 32, 640>}, {transform_indices = @transform_7, window_bounds = array<i64: 32, 640>}, {transform_indices = @transform_8, window_bounds = array<i64: 32, 640>}, {transform_indices = @transform_9, window_bounds = array<i64: 32, 640>}, {transform_indices = @transform_10, window_bounds = array<i64: 1, 640>}, {transform_indices = @transform_11, window_bounds = array<i64: 8, 128>}, {transform_indices = @transform_12, window_bounds = array<i64: 8, 128>}]} {
    %c0 = arith.constant 0 : index
    %c0_0 = arith.constant 0 : index
    %0 = vector.load %arg2[%c0, %c0_0] : memref<8x32xf32, #tpu.memory_space<vmem>>, vector<8x32xf32>
    %c0_1 = arith.constant 0 : index
    %c0_2 = arith.constant 0 : index
    %1 = vector.load %arg8[%c0_1, %c0_2] : memref<32x640xf32, #tpu.memory_space<vmem>>, vector<32x640xf32>
    %cst = arith.constant dense<0.000000e+00> : vector<8x640xf32>
    %2 = tpu.matmul %0, %1, %cst {dimension_numbers = #tpu.dot_dimension_numbers<[1], [0], [0], [1], [0, 0, 1, 1], [], []>} : vector<8x32xf32>, vector<32x640xf32>, vector<8x640xf32> -> vector<8x640xf32>
    %c0_3 = arith.constant 0 : index
    %c0_4 = arith.constant 0 : index
    %3 = vector.load %arg3[%c0_3, %c0_4] : memref<8x32xf32, #tpu.memory_space<vmem>>, vector<8x32xf32>
    %c0_5 = arith.constant 0 : index
    %c0_6 = arith.constant 0 : index
    %4 = vector.load %arg9[%c0_5, %c0_6] : memref<32x640xf32, #tpu.memory_space<vmem>>, vector<32x640xf32>
    %cst_7 = arith.constant dense<0.000000e+00> : vector<8x640xf32>
    %5 = tpu.matmul %3, %4, %cst_7 {dimension_numbers = #tpu.dot_dimension_numbers<[1], [0], [0], [1], [0, 0, 1, 1], [], []>} : vector<8x32xf32>, vector<32x640xf32>, vector<8x640xf32> -> vector<8x640xf32>
    %6 = arith.addf %2, %5 : vector<8x640xf32>
    %c0_8 = arith.constant 0 : index
    %c0_9 = arith.constant 0 : index
    %7 = vector.load %arg4[%c0_8, %c0_9] : memref<8x32xf32, #tpu.memory_space<vmem>>, vector<8x32xf32>
    %c0_10 = arith.constant 0 : index
    %c0_11 = arith.constant 0 : index
    %8 = vector.load %arg10[%c0_10, %c0_11] : memref<32x640xf32, #tpu.memory_space<vmem>>, vector<32x640xf32>
    %cst_12 = arith.constant dense<0.000000e+00> : vector<8x640xf32>
    %9 = tpu.matmul %7, %8, %cst_12 {dimension_numbers = #tpu.dot_dimension_numbers<[1], [0], [0], [1], [0, 0, 1, 1], [], []>} : vector<8x32xf32>, vector<32x640xf32>, vector<8x640xf32> -> vector<8x640xf32>
    %10 = arith.addf %6, %9 : vector<8x640xf32>
    %c0_13 = arith.constant 0 : index
    %c0_14 = arith.constant 0 : index
    %11 = vector.load %arg5[%c0_13, %c0_14] : memref<8x32xf32, #tpu.memory_space<vmem>>, vector<8x32xf32>
    %c0_15 = arith.constant 0 : index
    %c0_16 = arith.constant 0 : index
    %12 = vector.load %arg11[%c0_15, %c0_16] : memref<32x640xf32, #tpu.memory_space<vmem>>, vector<32x640xf32>
    %cst_17 = arith.constant dense<0.000000e+00> : vector<8x640xf32>
    %13 = tpu.matmul %11, %12, %cst_17 {dimension_numbers = #tpu.dot_dimension_numbers<[1], [0], [0], [1], [0, 0, 1, 1], [], []>} : vector<8x32xf32>, vector<32x640xf32>, vector<8x640xf32> -> vector<8x640xf32>
    %14 = arith.addf %10, %13 : vector<8x640xf32>
    %c0_18 = arith.constant 0 : index
    %c0_19 = arith.constant 0 : index
    %15 = vector.load %arg12[%c0_18, %c0_19] : memref<1x640xf32, #tpu.memory_space<vmem>>, vector<1x640xf32>
    %16 = vector.broadcast %15 : vector<1x640xf32> to vector<8x640xf32>
    %17 = arith.addf %14, %16 : vector<8x640xf32>
    %18 = vector.extract_strided_slice %17 {offsets = [0, 0], sizes = [8, 128], strides = [1, 1]} : vector<8x640xf32> to vector<8x128xf32>
    %cst_20 = arith.constant 5.000000e-01 : f32
    %19 = vector.broadcast %cst_20 : f32 to vector<8x128xf32>
    %20 = arith.mulf %19, %18 : vector<8x128xf32>
    %21 = math.tanh %20 : vector<8x128xf32>
    %cst_21 = arith.constant 5.000000e-01 : f32
    %22 = vector.broadcast %cst_21 : f32 to vector<8x128xf32>
    %23 = arith.mulf %22, %21 : vector<8x128xf32>
    %cst_22 = arith.constant 5.000000e-01 : f32
    %24 = vector.broadcast %cst_22 : f32 to vector<8x128xf32>
    %25 = arith.addf %23, %24 : vector<8x128xf32>
    %26 = vector.extract_strided_slice %17 {offsets = [0, 128], sizes = [8, 128], strides = [1, 1]} : vector<8x640xf32> to vector<8x128xf32>
    %27 = math.tanh %26 : vector<8x128xf32>
    %28 = vector.extract_strided_slice %17 {offsets = [0, 256], sizes = [8, 128], strides = [1, 1]} : vector<8x640xf32> to vector<8x128xf32>
    %cst_23 = arith.constant 5.000000e-01 : f32
    %29 = vector.broadcast %cst_23 : f32 to vector<8x128xf32>
    %30 = arith.mulf %29, %28 : vector<8x128xf32>
    %31 = math.tanh %30 : vector<8x128xf32>
    %cst_24 = arith.constant 5.000000e-01 : f32
    %32 = vector.broadcast %cst_24 : f32 to vector<8x128xf32>
    %33 = arith.mulf %32, %31 : vector<8x128xf32>
    %cst_25 = arith.constant 5.000000e-01 : f32
    %34 = vector.broadcast %cst_25 : f32 to vector<8x128xf32>
    %35 = arith.addf %33, %34 : vector<8x128xf32>
    %36 = vector.extract_strided_slice %17 {offsets = [0, 384], sizes = [8, 128], strides = [1, 1]} : vector<8x640xf32> to vector<8x128xf32>
    %cst_26 = arith.constant 5.000000e-01 : f32
    %37 = vector.broadcast %cst_26 : f32 to vector<8x128xf32>
    %38 = arith.mulf %37, %36 : vector<8x128xf32>
    %39 = math.tanh %38 : vector<8x128xf32>
    %cst_27 = arith.constant 5.000000e-01 : f32
    %40 = vector.broadcast %cst_27 : f32 to vector<8x128xf32>
    %41 = arith.mulf %40, %39 : vector<8x128xf32>
    %cst_28 = arith.constant 5.000000e-01 : f32
    %42 = vector.broadcast %cst_28 : f32 to vector<8x128xf32>
    %43 = arith.addf %41, %42 : vector<8x128xf32>
    %44 = vector.extract_strided_slice %17 {offsets = [0, 512], sizes = [8, 128], strides = [1, 1]} : vector<8x640xf32> to vector<8x128xf32>
    %cst_29 = arith.constant 5.000000e-01 : f32
    %45 = vector.broadcast %cst_29 : f32 to vector<8x128xf32>
    %46 = arith.mulf %45, %44 : vector<8x128xf32>
    %47 = math.tanh %46 : vector<8x128xf32>
    %cst_30 = arith.constant 5.000000e-01 : f32
    %48 = vector.broadcast %cst_30 : f32 to vector<8x128xf32>
    %49 = arith.mulf %48, %47 : vector<8x128xf32>
    %cst_31 = arith.constant 5.000000e-01 : f32
    %50 = vector.broadcast %cst_31 : f32 to vector<8x128xf32>
    %51 = arith.addf %49, %50 : vector<8x128xf32>
    %c0_32 = arith.constant 0 : index
    %c0_33 = arith.constant 0 : index
    %52 = vector.load %arg6[%c0_32, %c0_33] : memref<8x128xf32, #tpu.memory_space<vmem>>, vector<8x128xf32>
    %c0_34 = arith.constant 0 : index
    %c0_35 = arith.constant 0 : index
    %53 = vector.load %arg7[%c0_34, %c0_35] : memref<8x128xf32, #tpu.memory_space<vmem>>, vector<8x128xf32>
    %54 = arith.mulf %43, %52 : vector<8x128xf32>
    %55 = arith.mulf %51, %53 : vector<8x128xf32>
    %56 = arith.addf %54, %55 : vector<8x128xf32>
    %57 = arith.mulf %25, %27 : vector<8x128xf32>
    %58 = arith.addf %56, %57 : vector<8x128xf32>
    %59 = math.tanh %58 : vector<8x128xf32>
    %60 = arith.mulf %35, %59 : vector<8x128xf32>
    %c0_36 = arith.constant 0 : index
    %c0_37 = arith.constant 0 : index
    %61 = vector.load %arg14[%c0_36, %c0_37] : memref<8x128xf32, #tpu.memory_space<vmem>>, vector<8x128xf32>
    tpu.vector_store %arg14[%c0_36, %c0_37], %58 {strides = array<i32>} : memref<8x128xf32, #tpu.memory_space<vmem>>, vector<8x128xf32>,
    %c0_38 = arith.constant 0 : index
    %c0_39 = arith.constant 0 : index
    %62 = vector.load %arg13[%c0_38, %c0_39] : memref<8x128xf32, #tpu.memory_space<vmem>>, vector<8x128xf32>
    tpu.vector_store %arg13[%c0_38, %c0_39], %60 {strides = array<i32>} : memref<8x128xf32, #tpu.memory_space<vmem>>, vector<8x128xf32>,
    return
  }
  func.func @transform_0(%arg0: i32, %arg1: i32) -> (i32, i32) {
    %c0_i32 = arith.constant 0 : i32
    %c0_i32_0 = arith.constant 0 : i32
    return %arg1, %c0_i32 : i32, i32
  }
  func.func @transform_1(%arg0: i32, %arg1: i32) -> (i32, i32) {
    %c0_i32 = arith.constant 0 : i32
    %c0_i32_0 = arith.constant 0 : i32
    return %arg1, %c0_i32 : i32, i32
  }
  func.func @transform_2(%arg0: i32, %arg1: i32) -> (i32, i32) {
    %c0_i32 = arith.constant 0 : i32
    %c0_i32_0 = arith.constant 0 : i32
    return %arg1, %c0_i32 : i32, i32
  }
  func.func @transform_3(%arg0: i32, %arg1: i32) -> (i32, i32) {
    %c0_i32 = arith.constant 0 : i32
    %c0_i32_0 = arith.constant 0 : i32
    return %arg1, %c0_i32 : i32, i32
  }
  func.func @transform_4(%arg0: i32, %arg1: i32) -> (i32, i32) {
    %c0_i32 = arith.constant 0 : i32
    return %arg1, %arg0 : i32, i32
  }
  func.func @transform_5(%arg0: i32, %arg1: i32) -> (i32, i32) {
    %c0_i32 = arith.constant 0 : i32
    return %arg1, %arg0 : i32, i32
  }
  func.func @transform_6(%arg0: i32, %arg1: i32) -> (i32, i32) {
    %c0_i32 = arith.constant 0 : i32
    %c0_i32_0 = arith.constant 0 : i32
    return %c0_i32, %arg0 : i32, i32
  }
  func.func @transform_7(%arg0: i32, %arg1: i32) -> (i32, i32) {
    %c0_i32 = arith.constant 0 : i32
    %c0_i32_0 = arith.constant 0 : i32
    return %c0_i32, %arg0 : i32, i32
  }
  func.func @transform_8(%arg0: i32, %arg1: i32) -> (i32, i32) {
    %c0_i32 = arith.constant 0 : i32
    %c0_i32_0 = arith.constant 0 : i32
    return %c0_i32, %arg0 : i32, i32
  }
  func.func @transform_9(%arg0: i32, %arg1: i32) -> (i32, i32) {
    %c0_i32 = arith.constant 0 : i32
    %c0_i32_0 = arith.constant 0 : i32
    return %c0_i32, %arg0 : i32, i32
  }
  func.func @transform_10(%arg0: i32, %arg1: i32) -> (i32, i32) {
    %c0_i32 = arith.constant 0 : i32
    %c0_i32_0 = arith.constant 0 : i32
    return %c0_i32, %arg0 : i32, i32
  }
  func.func @transform_11(%arg0: i32, %arg1: i32) -> (i32, i32) {
    %c0_i32 = arith.constant 0 : i32
    return %arg1, %arg0 : i32, i32
  }
  func.func @transform_12(%arg0: i32, %arg1: i32) -> (i32, i32) {
    %c0_i32 = arith.constant 0 : i32
    return %arg1, %arg0 : i32, i32
  }
}

</mosaic_0001>

<llo_original>
// kernel: mdlstm_cell_forward.1
$region0: #{mdlstm_cell_forward.1}
  #allocation0 [shape = 'u32[]', space=smem, size = 0x4, offset = 0x4, fixed_abs, tag = 'smem constant byte address 0x4 - core index']
  #allocation1 [shape = 'u32[144,128]{1,0:T(1,128)}', space=vmem, size = 0x12000, scoped, tag = 'internal scratch']
  %s0 = inlined_call_operand.vmem [shape: f32[8,32], index: 0, kind: input, shape index: {}]
  %s1 = inlined_call_operand.vmem [shape: f32[8,32], index: 1, kind: input, shape index: {}]
  %s2 = inlined_call_operand.vmem [shape: f32[8,32], index: 2, kind: input, shape index: {}]
  %s3 = inlined_call_operand.vmem [shape: f32[8,32], index: 3, kind: input, shape index: {}]
  %s4 = inlined_call_operand.vmem [shape: f32[8,128], index: 4, kind: input, shape index: {}]
  %s5 = inlined_call_operand.vmem [shape: f32[8,128], index: 5, kind: input, shape index: {}]
  %s6 = inlined_call_operand.hbm [shape: f32[32,640], index: 6, kind: input, shape index: {}]
  %s7 = inlined_call_operand.hbm [shape: f32[32,640], index: 7, kind: input, shape index: {}]
  %s8 = inlined_call_operand.hbm [shape: f32[32,640], index: 8, kind: input, shape index: {}]
  %s9 = inlined_call_operand.hbm [shape: f32[32,640], index: 9, kind: input, shape index: {}]
  %s10 = inlined_call_operand.hbm [shape: f32[1,640], index: 10, kind: input, shape index: {}]
  %s11 = inlined_call_operand.vmem [shape: f32[8,128], index: 11, kind: output, shape index: {0}]
  %s12 = inlined_call_operand.hbm [shape: f32[8,128], index: 12, kind: output, shape index: {1}]
  %13 = xla_tuple %s11, %s12
  %s14 = sld [smem:[#allocation0]]
  $region82: #{mdlstm_cell_forward.1} parent=0
    _
  %s16 = ssub.s32 1, %s14
  %s17 = scalar_select 0, %s16, %s14
  $region1: #{mdlstm_cell_forward.1} parent=0
    #allocation2 [shape = 'u8[81920]{0}', space=vmem, size = 0x14000, scoped, tag = 'input window, operand 6, single buffered']
    #allocation3 [shape = 's32[1]{0}', space=sflag, size = 0x4, scoped, tag = 'scoped memory for mdlstm_cell_forward.1']
    #allocation4 [shape = 's32[1]{0}', space=sflag, size = 0x4, scoped, tag = 'scoped memory for mdlstm_cell_forward.1']
    #allocation5 [shape = 'u8[81920]{0}', space=vmem, size = 0x14000, scoped, tag = 'input window, operand 7, single buffered']
    #allocation6 [shape = 's32[1]{0}', space=sflag, size = 0x4, scoped, tag = 'scoped memory for mdlstm_cell_forward.1']
    #allocation7 [shape = 'u8[81920]{0}', space=vmem, size = 0x14000, scoped, tag = 'input window, operand 8, single buffered']
    #allocation8 [shape = 'u8[81920]{0}', space=vmem, size = 0x14000, scoped, tag = 'input window, operand 9, single buffered']
    #allocation9 [shape = 's32[1]{0}', space=sflag, size = 0x4, scoped, tag = 'scoped memory for mdlstm_cell_forward.1']
    #allocation10 [shape = 'u8[2560]{0}', space=vmem, size = 0xc00, scoped, tag = 'input window, operand 10, single buffered']
    #allocation11 [shape = 'u8[4096]{0}', space=vmem, size = 0x1000, scoped, tag = 'output window, operand 1, single buffered']
    %18 = vsyncpa [#allocation3], 0
    %19 = vsyncpa [#allocation6], 0
    %20 = vsyncpa [#allocation9], 0
    %21 = vsyncpa [#allocation4], 0
    // Predicated region
    $region2: #{mdlstm_cell_forward.1} parent=1 // pred_check
      _
    $region3: #{mdlstm_cell_forward.1} parent=1 // pred_check_branch
      %23 = sbr.rel (0) target = $region5
    $region4: #{mdlstm_cell_forward.1} parent=1 // pred_region
      _
    $region5: #{mdlstm_cell_forward.1} parent=1 // pred_fallthru
      _
    // Predicated region
    $region6: #{mdlstm_cell_forward.1} parent=1 // pred_check
      _
    $region7: #{mdlstm_cell_forward.1} parent=1 // pred_check_branch
      %25 = sbr.rel (0) target = $region9
    $region8: #{mdlstm_cell_forward.1} parent=1 // pred_region
      _
    $region9: #{mdlstm_cell_forward.1} parent=1 // pred_fallthru
      _
    // Predicated region
    $region10: #{mdlstm_cell_forward.1} parent=1 // pred_check
      _
    $region11: #{mdlstm_cell_forward.1} parent=1 // pred_check_branch
      %27 = sbr.rel (0) target = $region13
    $region12: #{mdlstm_cell_forward.1} parent=1 // pred_region
      _
    $region13: #{mdlstm_cell_forward.1} parent=1 // pred_fallthru
      _
    // Predicated region
    $region14: #{mdlstm_cell_forward.1} parent=1 // pred_check
      _
    $region15: #{mdlstm_cell_forward.1} parent=1 // pred_check_branch
      %29 = sbr.rel (0) target = $region17
    $region16: #{mdlstm_cell_forward.1} parent=1 // pred_region
      _
    $region17: #{mdlstm_cell_forward.1} parent=1 // pred_fallthru
      _
    // Predicated region
    $region18: #{mdlstm_cell_forward.1} parent=1 // pred_check
      _
    $region19: #{mdlstm_cell_forward.1} parent=1 // pred_check_branch
      %31 = sbr.rel (0) target = $region21
    $region20: #{mdlstm_cell_forward.1} parent=1 // pred_region
      _
    $region21: #{mdlstm_cell_forward.1} parent=1 // pred_fallthru
      _
    // Predicated region
    $region22: #{mdlstm_cell_forward.1} parent=1 // pred_check
      _
    $region23: #{mdlstm_cell_forward.1} parent=1 // pred_check_branch
      %33 = sbr.rel (0) target = $region25
    $region24: #{mdlstm_cell_forward.1} parent=1 // pred_region
      _
    $region25: #{mdlstm_cell_forward.1} parent=1 // pred_fallthru
      _
    // Predicated region
    $region26: #{mdlstm_cell_forward.1} parent=1 // pred_check
      _
    $region27: #{mdlstm_cell_forward.1} parent=1 // pred_check_branch
      %35 = sbr.rel (0) target = $region29
    $region28: #{mdlstm_cell_forward.1} parent=1 // pred_region
      %s37 = ssub.s32 2560, 2560
      %38 = vsyncadd [#allocation3], %s37
      %s39 = sshll.u32 [#allocation2], 4
      %s40 = int_to_ptr.vmem [resolvable:$true] %s39
      %45 = dma.hbm_to_vmem [thread:$0]  %s6, 2560, %s40, [#allocation3], 640, 640, 40
    $region29: #{mdlstm_cell_forward.1} parent=1 // pred_fallthru
      _
    // Predicated region
    $region30: #{mdlstm_cell_forward.1} parent=1 // pred_check
      _
    $region31: #{mdlstm_cell_forward.1} parent=1 // pred_check_branch
      %47 = sbr.rel (0) target = $region33
    $region32: #{mdlstm_cell_forward.1} parent=1 // pred_region
      %s49 = ssub.s32 2560, 2560
      %50 = vsyncadd [#allocation6], %s49
      %s51 = sshll.u32 [#allocation5], 4
      %s52 = int_to_ptr.vmem [resolvable:$true] %s51
      %57 = dma.hbm_to_vmem [thread:$0]  %s7, 2560, %s52, [#allocation6], 640, 640, 40
    $region33: #{mdlstm_cell_forward.1} parent=1 // pred_fallthru
      _
    // Predicated region
    $region34: #{mdlstm_cell_forward.1} parent=1 // pred_check
      _
    $region35: #{mdlstm_cell_forward.1} parent=1 // pred_check_branch
      %59 = sbr.rel (0) target = $region37
    $region36: #{mdlstm_cell_forward.1} parent=1 // pred_region
      %s61 = ssub.s32 2560, 2560
      %62 = vsyncadd [#allocation6], %s61
      %s63 = sshll.u32 [#allocation7], 4
      %s64 = int_to_ptr.vmem [resolvable:$true] %s63
      %69 = dma.hbm_to_vmem [thread:$0]  %s8, 2560, %s64, [#allocation6], 640, 640, 40
    $region37: #{mdlstm_cell_forward.1} parent=1 // pred_fallthru
      _
    // Predicated region
    $region38: #{mdlstm_cell_forward.1} parent=1 // pred_check
      _
    $region39: #{mdlstm_cell_forward.1} parent=1 // pred_check_branch
      %71 = sbr.rel (0) target = $region41
    $region40: #{mdlstm_cell_forward.1} parent=1 // pred_region
      %s73 = ssub.s32 2560, 2560
      %74 = vsyncadd [#allocation9], %s73
      %s75 = sshll.u32 [#allocation8], 4
      %s76 = int_to_ptr.vmem [resolvable:$true] %s75
      %81 = dma.hbm_to_vmem [thread:$0]  %s9, 2560, %s76, [#allocation9], 640, 640, 40
    $region41: #{mdlstm_cell_forward.1} parent=1 // pred_fallthru
      _
    // Predicated region
    $region42: #{mdlstm_cell_forward.1} parent=1 // pred_check
      _
    $region43: #{mdlstm_cell_forward.1} parent=1 // pred_check_branch
      %83 = sbr.rel (0) target = $region45
    $region44: #{mdlstm_cell_forward.1} parent=1 // pred_region
      %s85 = ssub.s32 80, 80
      %86 = vsyncadd [#allocation9], %s85
      %s88 = sshll.u32 [#allocation10], 4
      %s89 = int_to_ptr.vmem [resolvable:$true] %s88
      %91 = dma.hbm_to_vmem [thread:$0]  %s10, 80, %s89, [#allocation9]
    $region45: #{mdlstm_cell_forward.1} parent=1 // pred_fallthru
      _
    // Predicated region
    $region46: #{mdlstm_cell_forward.1} parent=1 // pred_check
      _
    $region47: #{mdlstm_cell_forward.1} parent=1 // pred_check_branch
      %93 = sbr.rel (0) target = $region49
    $region48: #{mdlstm_cell_forward.1} parent=1 // pred_region
      %94 = dma.done [#allocation3], 2560
    $region49: #{mdlstm_cell_forward.1} parent=1 // pred_fallthru
      _
    // Predicated region
    $region50: #{mdlstm_cell_forward.1} parent=1 // pred_check
      _
    $region51: #{mdlstm_cell_forward.1} parent=1 // pred_check_branch
      %96 = sbr.rel (0) target = $region53
    $region52: #{mdlstm_cell_forward.1} parent=1 // pred_region
      %97 = dma.done [#allocation6], 2560
    $region53: #{mdlstm_cell_forward.1} parent=1 // pred_fallthru
      _
    // Predicated region
    $region54: #{mdlstm_cell_forward.1} parent=1 // pred_check
      _
    $region55: #{mdlstm_cell_forward.1} parent=1 // pred_check_branch
      %99 = sbr.rel (0) target = $region57
    $region56: #{mdlstm_cell_forward.1} parent=1 // pred_region
      %100 = dma.done [#allocation6], 2560
    $region57: #{mdlstm_cell_forward.1} parent=1 // pred_fallthru
      _
    // Predicated region
    $region58: #{mdlstm_cell_forward.1} parent=1 // pred_check
      _
    $region59: #{mdlstm_cell_forward.1} parent=1 // pred_check_branch
      %102 = sbr.rel (0) target = $region61
    $region60: #{mdlstm_cell_forward.1} parent=1 // pred_region
      %103 = dma.done [#allocation9], 2560
    $region61: #{mdlstm_cell_forward.1} parent=1 // pred_fallthru
      _
    // Predicated region
    $region62: #{mdlstm_cell_forward.1} parent=1 // pred_check
      _
    $region63: #{mdlstm_cell_forward.1} parent=1 // pred_check_branch
      %105 = sbr.rel (0) target = $region65
    $region64: #{mdlstm_cell_forward.1} parent=1 // pred_region
      %106 = dma.done [#allocation9], 80
    $region65: #{mdlstm_cell_forward.1} parent=1 // pred_fallthru
      _
    %v107 = vld [vmem:[%s0] sm:$0xff]
    %v108 = vld [vmem:[#allocation2] sm:$0xff]
    %v109 = vld [vmem:[#allocation2 + $0x8] sm:$0xff]
    %v110 = vld [vmem:[#allocation2 + $0x10] sm:$0xff]
    %v111 = vld [vmem:[#allocation2 + $0x18] sm:$0xff]
    %v112 = vld [vmem:[#allocation2 + $0x20] sm:$0xff]
    %v113 = vld [vmem:[#allocation2 + $0x28] sm:$0xff]
    %v114 = vld [vmem:[#allocation2 + $0x30] sm:$0xff]
    %v115 = vld [vmem:[#allocation2 + $0x38] sm:$0xff]
    %v116 = vld [vmem:[#allocation2 + $0x40] sm:$0xff]
    %v117 = vld [vmem:[#allocation2 + $0x48] sm:$0xff]
    %v118 = vld [vmem:[#allocation2 + $0x50] sm:$0xff]
    %v119 = vld [vmem:[#allocation2 + $0x58] sm:$0xff]
    %v120 = vld [vmem:[#allocation2 + $0x60] sm:$0xff]
    %v121 = vld [vmem:[#allocation2 + $0x68] sm:$0xff]
    %v122 = vld [vmem:[#allocation2 + $0x70] sm:$0xff]
    %v123 = vld [vmem:[#allocation2 + $0x78] sm:$0xff]
    %v124 = vld [vmem:[#allocation2 + $0x80] sm:$0xff]
    %v125 = vld [vmem:[#allocation2 + $0x88] sm:$0xff]
    %v126 = vld [vmem:[#allocation2 + $0x90] sm:$0xff]
    %v127 = vld [vmem:[#allocation2 + $0x98] sm:$0xff]
    %v128 = vld [vmem:[%s1] sm:$0xff]
    %v129 = vld [vmem:[#allocation5] sm:$0xff]
    %v130 = vld [vmem:[#allocation5 + $0x8] sm:$0xff]
    %v131 = vld [vmem:[#allocation5 + $0x10] sm:$0xff]
    %v132 = vld [vmem:[#allocation5 + $0x18] sm:$0xff]
    %v133 = vld [vmem:[#allocation5 + $0x20] sm:$0xff]
    %v134 = vld [vmem:[#allocation5 + $0x28] sm:$0xff]
    %v135 = vld [vmem:[#allocation5 + $0x30] sm:$0xff]
    %v136 = vld [vmem:[#allocation5 + $0x38] sm:$0xff]
    %v137 = vld [vmem:[#allocation5 + $0x40] sm:$0xff]
    %v138 = vld [vmem:[#allocation5 + $0x48] sm:$0xff]
    %v139 = vld [vmem:[#allocation5 + $0x50] sm:$0xff]
    %v140 = vld [vmem:[#allocation5 + $0x58] sm:$0xff]
    %v141 = vld [vmem:[#allocation5 + $0x60] sm:$0xff]
    %v142 = vld [vmem:[#allocation5 + $0x68] sm:$0xff]
    %v143 = vld [vmem:[#allocation5 + $0x70] sm:$0xff]
    %v144 = vld [vmem:[#allocation5 + $0x78] sm:$0xff]
    %v145 = vld [vmem:[#allocation5 + $0x80] sm:$0xff]
    %v146 = vld [vmem:[#allocation5 + $0x88] sm:$0xff]
    %v147 = vld [vmem:[#allocation5 + $0x90] sm:$0xff]
    %v148 = vld [vmem:[#allocation5 + $0x98] sm:$0xff]
    %vm149 = vcmask 261120
    %v151 = vsel %vm149, %v128, 0
    %153 = vmatprep.subr.mxu0 %v130
    %154 = vmatpush1.msra.mxu0 %v129
    %155 = vmatprep.subr.mxu0 %v135
    %156 = vmatpush1.msra.mxu0 %v134
    %157 = vmatprep.subr.mxu0 %v140
    %158 = vmatpush1.msra.mxu0 %v139
    %159 = vmatprep.subr.mxu0 %v145
    %160 = vmatpush1.msra.mxu0 %v144
    %161 = vmatprep.subr.mxu0 0.0
    %162 = vmatpush1.msra.mxu0 0.0
    %163 = vmatprep.subr.mxu0 0.0
    %164 = vmatpush1.msra.mxu0 0.0
    %165 = vmatprep.subr.mxu0 0.0
    %166 = vmatpush1.msra.mxu0 0.0
    %167 = vmatprep.subr.mxu0 0.0
    %168 = vmatpush1.msra.mxu0 0.0
    %169 = vmatprep.subr.mxu0 0.0
    %170 = vmatpush1.msra.mxu0 0.0
    %171 = vmatprep.subr.mxu0 0.0
    %172 = vmatpush1.msra.mxu0 0.0
    %173 = vmatprep.subr.mxu0 0.0
    %174 = vmatpush1.msra.mxu0 0.0
    %175 = vmatprep.subr.mxu0 0.0
    %176 = vmatpush1.msra.mxu0 0.0
    %177 = vmatprep.subr.mxu0 0.0
    %178 = vmatpush1.msra.mxu0 0.0
    %179 = vmatprep.subr.mxu0 0.0
    %180 = vmatpush1.msra.mxu0 0.0
    %181 = vmatprep.subr.mxu0 0.0
    %182 = vmatpush1.msra.mxu0 0.0
    %183 = vmatprep.subr.mxu0 0.0
    %184 = vmatpush1.msra.mxu0 0.0
    %185 = vmatprep.subr.mxu0 0.0
    %186 = vmatpush1.msra.mxu0 0.0
    %187 = vmatprep.subr.mxu0 0.0
    %188 = vmatpush1.msra.mxu0 0.0
    %189 = vmatprep.subr.mxu0 0.0
    %190 = vmatpush1.msra.mxu0 0.0
    %191 = vmatprep.subr.mxu0 0.0
    %192 = vmatpush1.msra.mxu0 0.0
    %193 = vmatprep.subr.mxu0 0.0
    %194 = vmatpush1.msra.mxu0 0.0
    %195 = vmatprep.subr.mxu0 0.0
    %196 = vmatpush1.msra.mxu0 0.0
    %197 = vmatprep.subr.mxu0 0.0
    %198 = vmatpush1.msra.mxu0 0.0
    %199 = vmatprep.subr.mxu0 0.0
    %200 = vmatpush1.msra.mxu0 0.0
    %201 = vmatprep.subr.mxu0 0.0
    %202 = vmatpush1.msra.mxu0 0.0
    %203 = vmatprep.subr.mxu0 0.0
    %204 = vmatpush1.msra.mxu0 0.0
    %205 = vmatprep.subr.mxu0 0.0
    %206 = vmatpush1.msra.mxu0 0.0
    %207 = vmatprep.subr.mxu0 0.0
    %208 = vmatpush1.msra.mxu0 0.0
    %209 = vmatprep.subr.mxu0 0.0
    %210 = vmatpush1.msra.mxu0 0.0
    %211 = vmatprep.subr.mxu0 0.0
    %212 = vmatpush1.msra.mxu0 0.0
    %213 = vmatprep.subr.mxu0 0.0
    %214 = vmatpush1.msra.mxu0 0.0
    %215 = vmatprep.subr.mxu0 0.0
    %216 = vmatpush1.msra.mxu0 0.0
    %217 = vmatprep.mubr.f32.mxu0 0.0
    %218 = vmatmul.mubr.f32.gmra.mrb[0].mxu0 %v151
    %v219 = vpop.f32.mrb[0].mxu0
    %v220 = vadd.f32 0.0, %v219
    %v221 = vpop.f32.mrb[0].mxu0
    %v222 = vadd.f32 0.0, %v221
    %223 = vdwg.mxu0
    %224 = vmatprep.subr.mxu0 %v132
    %225 = vmatpush1.msra.mxu0 %v131
    %226 = vmatprep.subr.mxu0 %v137
    %227 = vmatpush1.msra.mxu0 %v136
    %228 = vmatprep.subr.mxu0 %v142
    %229 = vmatpush1.msra.mxu0 %v141
    %230 = vmatprep.subr.mxu0 %v147
    %231 = vmatpush1.msra.mxu0 %v146
    %232 = vmatprep.subr.mxu0 0.0
    %233 = vmatpush1.msra.mxu0 0.0
    %234 = vmatprep.subr.mxu0 0.0
    %235 = vmatpush1.msra.mxu0 0.0
    %236 = vmatprep.subr.mxu0 0.0
    %237 = vmatpush1.msra.mxu0 0.0
    %238 = vmatprep.subr.mxu0 0.0
    %239 = vmatpush1.msra.mxu0 0.0
    %240 = vmatprep.subr.mxu0 0.0
    %241 = vmatpush1.msra.mxu0 0.0
    %242 = vmatprep.subr.mxu0 0.0
    %243 = vmatpush1.msra.mxu0 0.0
    %244 = vmatprep.subr.mxu0 0.0
    %245 = vmatpush1.msra.mxu0 0.0
    %246 = vmatprep.subr.mxu0 0.0
    %247 = vmatpush1.msra.mxu0 0.0
    %248 = vmatprep.subr.mxu0 0.0
    %249 = vmatpush1.msra.mxu0 0.0
    %250 = vmatprep.subr.mxu0 0.0
    %251 = vmatpush1.msra.mxu0 0.0
    %252 = vmatprep.subr.mxu0 0.0
    %253 = vmatpush1.msra.mxu0 0.0
    %254 = vmatprep.subr.mxu0 0.0
    %255 = vmatpush1.msra.mxu0 0.0
    %256 = vmatprep.subr.mxu0 0.0
    %257 = vmatpush1.msra.mxu0 0.0
    %258 = vmatprep.subr.mxu0 0.0
    %259 = vmatpush1.msra.mxu0 0.0
    %260 = vmatprep.subr.mxu0 0.0
    %261 = vmatpush1.msra.mxu0 0.0
    %262 = vmatprep.subr.mxu0 0.0
    %263 = vmatpush1.msra.mxu0 0.0
    %264 = vmatprep.subr.mxu0 0.0
    %265 = vmatpush1.msra.mxu0 0.0
    %266 = vmatprep.subr.mxu0 0.0
    %267 = vmatpush1.msra.mxu0 0.0
    %268 = vmatprep.subr.mxu0 0.0
    %269 = vmatpush1.msra.mxu0 0.0
    %270 = vmatprep.subr.mxu0 0.0
    %271 = vmatpush1.msra.mxu0 0.0
    %272 = vmatprep.subr.mxu0 0.0
    %273 = vmatpush1.msra.mxu0 0.0
    %274 = vmatprep.subr.mxu0 0.0
    %275 = vmatpush1.msra.mxu0 0.0
    %276 = vmatprep.subr.mxu0 0.0
    %277 = vmatpush1.msra.mxu0 0.0
    %278 = vmatprep.subr.mxu0 0.0
    %279 = vmatpush1.msra.mxu0 0.0
    %280 = vmatprep.subr.mxu0 0.0
    %281 = vmatpush1.msra.mxu0 0.0
    %282 = vmatprep.subr.mxu0 0.0
    %283 = vmatpush1.msra.mxu0 0.0
    %284 = vmatprep.subr.mxu0 0.0
    %285 = vmatpush1.msra.mxu0 0.0
    %286 = vmatprep.subr.mxu0 0.0
    %287 = vmatpush1.msra.mxu0 0.0
    %288 = vmatprep.mubr.f32.mxu0 0.0
    %289 = vmatmul.mubr.f32.gmra.mrb[0].mxu0 %v151
    %v290 = vpop.f32.mrb[0].mxu0
    %v291 = vadd.f32 0.0, %v290
    %v292 = vpop.f32.mrb[0].mxu0
    %v293 = vadd.f32 0.0, %v292
    %294 = vdwg.mxu0
    %295 = vmatprep.subr.mxu0 0.0
    %296 = vmatpush1.msra.mxu0 %v133
    %297 = vmatprep.subr.mxu0 0.0
    %298 = vmatpush1.msra.mxu0 %v138
    %299 = vmatprep.subr.mxu0 0.0
    %300 = vmatpush1.msra.mxu0 %v143
    %301 = vmatprep.subr.mxu0 0.0
    %302 = vmatpush1.msra.mxu0 %v148
    %303 = vmatprep.subr.mxu0 0.0
    %304 = vmatpush1.msra.mxu0 0.0
    %305 = vmatprep.subr.mxu0 0.0
    %306 = vmatpush1.msra.mxu0 0.0
    %307 = vmatprep.subr.mxu0 0.0
    %308 = vmatpush1.msra.mxu0 0.0
    %309 = vmatprep.subr.mxu0 0.0
    %310 = vmatpush1.msra.mxu0 0.0
    %311 = vmatprep.subr.mxu0 0.0
    %312 = vmatpush1.msra.mxu0 0.0
    %313 = vmatprep.subr.mxu0 0.0
    %314 = vmatpush1.msra.mxu0 0.0
    %315 = vmatprep.subr.mxu0 0.0
    %316 = vmatpush1.msra.mxu0 0.0
    %317 = vmatprep.subr.mxu0 0.0
    %318 = vmatpush1.msra.mxu0 0.0
    %319 = vmatprep.subr.mxu0 0.0
    %320 = vmatpush1.msra.mxu0 0.0
    %321 = vmatprep.subr.mxu0 0.0
    %322 = vmatpush1.msra.mxu0 0.0
    %323 = vmatprep.subr.mxu0 0.0
    %324 = vmatpush1.msra.mxu0 0.0
    %325 = vmatprep.subr.mxu0 0.0
    %326 = vmatpush1.msra.mxu0 0.0
    %327 = vmatprep.subr.mxu0 0.0
    %328 = vmatpush1.msra.mxu0 0.0
    %329 = vmatprep.subr.mxu0 0.0
    %330 = vmatpush1.msra.mxu0 0.0
    %331 = vmatprep.subr.mxu0 0.0
    %332 = vmatpush1.msra.mxu0 0.0
    %333 = vmatprep.subr.mxu0 0.0
    %334 = vmatpush1.msra.mxu0 0.0
    %335 = vmatprep.subr.mxu0 0.0
    %336 = vmatpush1.msra.mxu0 0.0
    %337 = vmatprep.subr.mxu0 0.0
    %338 = vmatpush1.msra.mxu0 0.0
    %339 = vmatprep.subr.mxu0 0.0
    %340 = vmatpush1.msra.mxu0 0.0
    %341 = vmatprep.subr.mxu0 0.0
    %342 = vmatpush1.msra.mxu0 0.0
    %343 = vmatprep.subr.mxu0 0.0
    %344 = vmatpush1.msra.mxu0 0.0
    %345 = vmatprep.subr.mxu0 0.0
    %346 = vmatpush1.msra.mxu0 0.0
    %347 = vmatprep.subr.mxu0 0.0
    %348 = vmatpush1.msra.mxu0 0.0
    %349 = vmatprep.subr.mxu0 0.0
    %350 = vmatpush1.msra.mxu0 0.0
    %351 = vmatprep.subr.mxu0 0.0
    %352 = vmatpush1.msra.mxu0 0.0
    %353 = vmatprep.subr.mxu0 0.0
    %354 = vmatpush1.msra.mxu0 0.0
    %355 = vmatprep.subr.mxu0 0.0
    %356 = vmatpush1.msra.mxu0 0.0
    %357 = vmatprep.subr.mxu0 0.0
    %358 = vmatpush1.msra.mxu0 0.0
    %359 = vmatprep.mubr.f32.mxu0 0.0
    %360 = vmatmul.mubr.f32.gmra.mrb[0].mxu0 %v151
    %v361 = vpop.f32.mrb[0].mxu0
    %v362 = vadd.f32 0.0, %v361
    %v363 = vpop.f32.mrb[0].mxu0
    %364 = vdwg.mxu0
    %v366 = vsel %vm149, %v107, 0
    %368 = vmatprep.subr.mxu0 %v109
    %369 = vmatpush1.msra.mxu0 %v108
    %370 = vmatprep.subr.mxu0 %v114
    %371 = vmatpush1.msra.mxu0 %v113
    %372 = vmatprep.subr.mxu0 %v119
    %373 = vmatpush1.msra.mxu0 %v118
    %374 = vmatprep.subr.mxu0 %v124
    %375 = vmatpush1.msra.mxu0 %v123
    %376 = vmatprep.subr.mxu0 0.0
    %377 = vmatpush1.msra.mxu0 0.0
    %378 = vmatprep.subr.mxu0 0.0
    %379 = vmatpush1.msra.mxu0 0.0
    %380 = vmatprep.subr.mxu0 0.0
    %381 = vmatpush1.msra.mxu0 0.0
    %382 = vmatprep.subr.mxu0 0.0
    %383 = vmatpush1.msra.mxu0 0.0
    %384 = vmatprep.subr.mxu0 0.0
    %385 = vmatpush1.msra.mxu0 0.0
    %386 = vmatprep.subr.mxu0 0.0
    %387 = vmatpush1.msra.mxu0 0.0
    %388 = vmatprep.subr.mxu0 0.0
    %389 = vmatpush1.msra.mxu0 0.0
    %390 = vmatprep.subr.mxu0 0.0
    %391 = vmatpush1.msra.mxu0 0.0
    %392 = vmatprep.subr.mxu0 0.0
    %393 = vmatpush1.msra.mxu0 0.0
    %394 = vmatprep.subr.mxu0 0.0
    %395 = vmatpush1.msra.mxu0 0.0
    %396 = vmatprep.subr.mxu0 0.0
    %397 = vmatpush1.msra.mxu0 0.0
    %398 = vmatprep.subr.mxu0 0.0
    %399 = vmatpush1.msra.mxu0 0.0
    %400 = vmatprep.subr.mxu0 0.0
    %401 = vmatpush1.msra.mxu0 0.0
    %402 = vmatprep.subr.mxu0 0.0
    %403 = vmatpush1.msra.mxu0 0.0
    %404 = vmatprep.subr.mxu0 0.0
    %405 = vmatpush1.msra.mxu0 0.0
    %406 = vmatprep.subr.mxu0 0.0
    %407 = vmatpush1.msra.mxu0 0.0
    %408 = vmatprep.subr.mxu0 0.0
    %409 = vmatpush1.msra.mxu0 0.0
    %410 = vmatprep.subr.mxu0 0.0
    %411 = vmatpush1.msra.mxu0 0.0
    %412 = vmatprep.subr.mxu0 0.0
    %413 = vmatpush1.msra.mxu0 0.0
    %414 = vmatprep.subr.mxu0 0.0
    %415 = vmatpush1.msra.mxu0 0.0
    %416 = vmatprep.subr.mxu0 0.0
    %417 = vmatpush1.msra.mxu0 0.0
    %418 = vmatprep.subr.mxu0 0.0
    %419 = vmatpush1.msra.mxu0 0.0
    %420 = vmatprep.subr.mxu0 0.0
    %421 = vmatpush1.msra.mxu0 0.0
    %422 = vmatprep.subr.mxu0 0.0
    %423 = vmatpush1.msra.mxu0 0.0
    %424 = vmatprep.subr.mxu0 0.0
    %425 = vmatpush1.msra.mxu0 0.0
    %426 = vmatprep.subr.mxu0 0.0
    %427 = vmatpush1.msra.mxu0 0.0
    %428 = vmatprep.subr.mxu0 0.0
    %429 = vmatpush1.msra.mxu0 0.0
    %430 = vmatprep.subr.mxu0 0.0
    %431 = vmatpush1.msra.mxu0 0.0
    %432 = vmatprep.mubr.f32.mxu0 0.0
    %433 = vmatmul.mubr.f32.gmra.mrb[0].mxu0 %v366
    %v434 = vpop.f32.mrb[0].mxu0
    %v435 = vadd.f32 %v220, %v434
    %v436 = vpop.f32.mrb[0].mxu0
    %v437 = vadd.f32 %v222, %v436
    %438 = vdwg.mxu0
    %439 = vmatprep.subr.mxu0 %v111
    %440 = vmatpush1.msra.mxu0 %v110
    %441 = vmatprep.subr.mxu0 %v116
    %442 = vmatpush1.msra.mxu0 %v115
    %443 = vmatprep.subr.mxu0 %v121
    %444 = vmatpush1.msra.mxu0 %v120
    %445 = vmatprep.subr.mxu0 %v126
    %446 = vmatpush1.msra.mxu0 %v125
    %447 = vmatprep.subr.mxu0 0.0
    %448 = vmatpush1.msra.mxu0 0.0
    %449 = vmatprep.subr.mxu0 0.0
    %450 = vmatpush1.msra.mxu0 0.0
    %451 = vmatprep.subr.mxu0 0.0
    %452 = vmatpush1.msra.mxu0 0.0
    %453 = vmatprep.subr.mxu0 0.0
    %454 = vmatpush1.msra.mxu0 0.0
    %455 = vmatprep.subr.mxu0 0.0
    %456 = vmatpush1.msra.mxu0 0.0
    %457 = vmatprep.subr.mxu0 0.0
    %458 = vmatpush1.msra.mxu0 0.0
    %459 = vmatprep.subr.mxu0 0.0
    %460 = vmatpush1.msra.mxu0 0.0
    %461 = vmatprep.subr.mxu0 0.0
    %462 = vmatpush1.msra.mxu0 0.0
    %463 = vmatprep.subr.mxu0 0.0
    %464 = vmatpush1.msra.mxu0 0.0
    %465 = vmatprep.subr.mxu0 0.0
    %466 = vmatpush1.msra.mxu0 0.0
    %467 = vmatprep.subr.mxu0 0.0
    %468 = vmatpush1.msra.mxu0 0.0
    %469 = vmatprep.subr.mxu0 0.0
    %470 = vmatpush1.msra.mxu0 0.0
    %471 = vmatprep.subr.mxu0 0.0
    %472 = vmatpush1.msra.mxu0 0.0
    %473 = vmatprep.subr.mxu0 0.0
    %474 = vmatpush1.msra.mxu0 0.0
    %475 = vmatprep.subr.mxu0 0.0
    %476 = vmatpush1.msra.mxu0 0.0
    %477 = vmatprep.subr.mxu0 0.0
    %478 = vmatpush1.msra.mxu0 0.0
    %479 = vmatprep.subr.mxu0 0.0
    %480 = vmatpush1.msra.mxu0 0.0
    %481 = vmatprep.subr.mxu0 0.0
    %482 = vmatpush1.msra.mxu0 0.0
    %483 = vmatprep.subr.mxu0 0.0
    %484 = vmatpush1.msra.mxu0 0.0
    %485 = vmatprep.subr.mxu0 0.0
    %486 = vmatpush1.msra.mxu0 0.0
    %487 = vmatprep.subr.mxu0 0.0
    %488 = vmatpush1.msra.mxu0 0.0
    %489 = vmatprep.subr.mxu0 0.0
    %490 = vmatpush1.msra.mxu0 0.0
    %491 = vmatprep.subr.mxu0 0.0
    %492 = vmatpush1.msra.mxu0 0.0
    %493 = vmatprep.subr.mxu0 0.0
    %494 = vmatpush1.msra.mxu0 0.0
    %495 = vmatprep.subr.mxu0 0.0
    %496 = vmatpush1.msra.mxu0 0.0
    %497 = vmatprep.subr.mxu0 0.0
    %498 = vmatpush1.msra.mxu0 0.0
    %499 = vmatprep.subr.mxu0 0.0
    %500 = vmatpush1.msra.mxu0 0.0
    %501 = vmatprep.subr.mxu0 0.0
    %502 = vmatpush1.msra.mxu0 0.0
    %503 = vmatprep.mubr.f32.mxu0 0.0
    %504 = vmatmul.mubr.f32.gmra.mrb[0].mxu0 %v366
    %v505 = vpop.f32.mrb[0].mxu0
    %v506 = vadd.f32 %v291, %v505
    %v507 = vpop.f32.mrb[0].mxu0
    %v508 = vadd.f32 %v293, %v507
    %509 = vdwg.mxu0
    %510 = vmatprep.subr.mxu0 0.0
    %511 = vmatpush1.msra.mxu0 %v112
    %512 = vmatprep.subr.mxu0 0.0
    %513 = vmatpush1.msra.mxu0 %v117
    %514 = vmatprep.subr.mxu0 0.0
    %515 = vmatpush1.msra.mxu0 %v122
    %516 = vmatprep.subr.mxu0 0.0
    %517 = vmatpush1.msra.mxu0 %v127
    %518 = vmatprep.subr.mxu0 0.0
    %519 = vmatpush1.msra.mxu0 0.0
    %520 = vmatprep.subr.mxu0 0.0
    %521 = vmatpush1.msra.mxu0 0.0
    %522 = vmatprep.subr.mxu0 0.0
    %523 = vmatpush1.msra.mxu0 0.0
    %524 = vmatprep.subr.mxu0 0.0
    %525 = vmatpush1.msra.mxu0 0.0
    %526 = vmatprep.subr.mxu0 0.0
    %527 = vmatpush1.msra.mxu0 0.0
    %528 = vmatprep.subr.mxu0 0.0
    %529 = vmatpush1.msra.mxu0 0.0
    %530 = vmatprep.subr.mxu0 0.0
    %531 = vmatpush1.msra.mxu0 0.0
    %532 = vmatprep.subr.mxu0 0.0
    %533 = vmatpush1.msra.mxu0 0.0
    %534 = vmatprep.subr.mxu0 0.0
    %535 = vmatpush1.msra.mxu0 0.0
    %536 = vmatprep.subr.mxu0 0.0
    %537 = vmatpush1.msra.mxu0 0.0
    %538 = vmatprep.subr.mxu0 0.0
    %539 = vmatpush1.msra.mxu0 0.0
    %540 = vmatprep.subr.mxu0 0.0
    %541 = vmatpush1.msra.mxu0 0.0
    %542 = vmatprep.subr.mxu0 0.0
    %543 = vmatpush1.msra.mxu0 0.0
    %544 = vmatprep.subr.mxu0 0.0
    %545 = vmatpush1.msra.mxu0 0.0
    %546 = vmatprep.subr.mxu0 0.0
    %547 = vmatpush1.msra.mxu0 0.0
    %548 = vmatprep.subr.mxu0 0.0
    %549 = vmatpush1.msra.mxu0 0.0
    %550 = vmatprep.subr.mxu0 0.0
    %551 = vmatpush1.msra.mxu0 0.0
    %552 = vmatprep.subr.mxu0 0.0
    %553 = vmatpush1.msra.mxu0 0.0
    %554 = vmatprep.subr.mxu0 0.0
    %555 = vmatpush1.msra.mxu0 0.0
    %556 = vmatprep.subr.mxu0 0.0
    %557 = vmatpush1.msra.mxu0 0.0
    %558 = vmatprep.subr.mxu0 0.0
    %559 = vmatpush1.msra.mxu0 0.0
    %560 = vmatprep.subr.mxu0 0.0
    %561 = vmatpush1.msra.mxu0 0.0
    %562 = vmatprep.subr.mxu0 0.0
    %563 = vmatpush1.msra.mxu0 0.0
    %564 = vmatprep.subr.mxu0 0.0
    %565 = vmatpush1.msra.mxu0 0.0
    %566 = vmatprep.subr.mxu0 0.0
    %567 = vmatpush1.msra.mxu0 0.0
    %568 = vmatprep.subr.mxu0 0.0
    %569 = vmatpush1.msra.mxu0 0.0
    %570 = vmatprep.subr.mxu0 0.0
    %571 = vmatpush1.msra.mxu0 0.0
    %572 = vmatprep.subr.mxu0 0.0
    %573 = vmatpush1.msra.mxu0 0.0
    %574 = vmatprep.mubr.f32.mxu0 0.0
    %575 = vmatmul.mubr.f32.gmra.mrb[0].mxu0 %v366
    %v576 = vpop.f32.mrb[0].mxu0
    %v577 = vadd.f32 %v362, %v576
    %v578 = vpop.f32.mrb[0].mxu0
    %579 = vdwg.mxu0
    %v580 = vld [vmem:[%s2] sm:$0xff]
    %v581 = vld [vmem:[#allocation7] sm:$0xff]
    %v582 = vld [vmem:[#allocation7 + $0x8] sm:$0xff]
    %v583 = vld [vmem:[#allocation7 + $0x10] sm:$0xff]
    %v584 = vld [vmem:[#allocation7 + $0x18] sm:$0xff]
    %v585 = vld [vmem:[#allocation7 + $0x20] sm:$0xff]
    %v586 = vld [vmem:[#allocation7 + $0x28] sm:$0xff]
    %v587 = vld [vmem:[#allocation7 + $0x30] sm:$0xff]
    %v588 = vld [vmem:[#allocation7 + $0x38] sm:$0xff]
    %v589 = vld [vmem:[#allocation7 + $0x40] sm:$0xff]
    %v590 = vld [vmem:[#allocation7 + $0x48] sm:$0xff]
    %v591 = vld [vmem:[#allocation7 + $0x50] sm:$0xff]
    %v592 = vld [vmem:[#allocation7 + $0x58] sm:$0xff]
    %v593 = vld [vmem:[#allocation7 + $0x60] sm:$0xff]
    %v594 = vld [vmem:[#allocation7 + $0x68] sm:$0xff]
    %v595 = vld [vmem:[#allocation7 + $0x70] sm:$0xff]
    %v596 = vld [vmem:[#allocation7 + $0x78] sm:$0xff]
    %v597 = vld [vmem:[#allocation7 + $0x80] sm:$0xff]
    %v598 = vld [vmem:[#allocation7 + $0x88] sm:$0xff]
    %v599 = vld [vmem:[#allocation7 + $0x90] sm:$0xff]
    %v600 = vld [vmem:[#allocation7 + $0x98] sm:$0xff]
    %v602 = vsel %vm149, %v580, 0
    %604 = vmatprep.subr.mxu0 %v582
    %605 = vmatpush1.msra.mxu0 %v581
    %606 = vmatprep.subr.mxu0 %v587
    %607 = vmatpush1.msra.mxu0 %v586
    %608 = vmatprep.subr.mxu0 %v592
    %609 = vmatpush1.msra.mxu0 %v591
    %610 = vmatprep.subr.mxu0 %v597
    %611 = vmatpush1.msra.mxu0 %v596
    %612 = vmatprep.subr.mxu0 0.0
    %613 = vmatpush1.msra.mxu0 0.0
    %614 = vmatprep.subr.mxu0 0.0
    %615 = vmatpush1.msra.mxu0 0.0
    %616 = vmatprep.subr.mxu0 0.0
    %617 = vmatpush1.msra.mxu0 0.0
    %618 = vmatprep.subr.mxu0 0.0
    %619 = vmatpush1.msra.mxu0 0.0
    %620 = vmatprep.subr.mxu0 0.0
    %621 = vmatpush1.msra.mxu0 0.0
    %622 = vmatprep.subr.mxu0 0.0
    %623 = vmatpush1.msra.mxu0 0.0
    %624 = vmatprep.subr.mxu0 0.0
    %625 = vmatpush1.msra.mxu0 0.0
    %626 = vmatprep.subr.mxu0 0.0
    %627 = vmatpush1.msra.mxu0 0.0
    %628 = vmatprep.subr.mxu0 0.0
    %629 = vmatpush1.msra.mxu0 0.0
    %630 = vmatprep.subr.mxu0 0.0
    %631 = vmatpush1.msra.mxu0 0.0
    %632 = vmatprep.subr.mxu0 0.0
    %633 = vmatpush1.msra.mxu0 0.0
    %634 = vmatprep.subr.mxu0 0.0
    %635 = vmatpush1.msra.mxu0 0.0
    %636 = vmatprep.subr.mxu0 0.0
    %637 = vmatpush1.msra.mxu0 0.0
    %638 = vmatprep.subr.mxu0 0.0
    %639 = vmatpush1.msra.mxu0 0.0
    %640 = vmatprep.subr.mxu0 0.0
    %641 = vmatpush1.msra.mxu0 0.0
    %642 = vmatprep.subr.mxu0 0.0
    %643 = vmatpush1.msra.mxu0 0.0
    %644 = vmatprep.subr.mxu0 0.0
    %645 = vmatpush1.msra.mxu0 0.0
    %646 = vmatprep.subr.mxu0 0.0
    %647 = vmatpush1.msra.mxu0 0.0
    %648 = vmatprep.subr.mxu0 0.0
    %649 = vmatpush1.msra.mxu0 0.0
    %650 = vmatprep.subr.mxu0 0.0
    %651 = vmatpush1.msra.mxu0 0.0
    %652 = vmatprep.subr.mxu0 0.0
    %653 = vmatpush1.msra.mxu0 0.0
    %654 = vmatprep.subr.mxu0 0.0
    %655 = vmatpush1.msra.mxu0 0.0
    %656 = vmatprep.subr.mxu0 0.0
    %657 = vmatpush1.msra.mxu0 0.0
    %658 = vmatprep.subr.mxu0 0.0
    %659 = vmatpush1.msra.mxu0 0.0
    %660 = vmatprep.subr.mxu0 0.0
    %661 = vmatpush1.msra.mxu0 0.0
    %662 = vmatprep.subr.mxu0 0.0
    %663 = vmatpush1.msra.mxu0 0.0
    %664 = vmatprep.subr.mxu0 0.0
    %665 = vmatpush1.msra.mxu0 0.0
    %666 = vmatprep.subr.mxu0 0.0
    %667 = vmatpush1.msra.mxu0 0.0
    %668 = vmatprep.mubr.f32.mxu0 0.0
    %669 = vmatmul.mubr.f32.gmra.mrb[0].mxu0 %v602
    %v670 = vpop.f32.mrb[0].mxu0
    %v671 = vadd.f32 0.0, %v670
    %v672 = vpop.f32.mrb[0].mxu0
    %v673 = vadd.f32 0.0, %v672
    %674 = vdwg.mxu0
    %675 = vmatprep.subr.mxu0 %v584
    %676 = vmatpush1.msra.mxu0 %v583
    %677 = vmatprep.subr.mxu0 %v589
    %678 = vmatpush1.msra.mxu0 %v588
    %679 = vmatprep.subr.mxu0 %v594
    %680 = vmatpush1.msra.mxu0 %v593
    %681 = vmatprep.subr.mxu0 %v599
    %682 = vmatpush1.msra.mxu0 %v598
    %683 = vmatprep.subr.mxu0 0.0
    %684 = vmatpush1.msra.mxu0 0.0
    %685 = vmatprep.subr.mxu0 0.0
    %686 = vmatpush1.msra.mxu0 0.0
    %687 = vmatprep.subr.mxu0 0.0
    %688 = vmatpush1.msra.mxu0 0.0
    %689 = vmatprep.subr.mxu0 0.0
    %690 = vmatpush1.msra.mxu0 0.0
    %691 = vmatprep.subr.mxu0 0.0
    %692 = vmatpush1.msra.mxu0 0.0
    %693 = vmatprep.subr.mxu0 0.0
    %694 = vmatpush1.msra.mxu0 0.0
    %695 = vmatprep.subr.mxu0 0.0
    %696 = vmatpush1.msra.mxu0 0.0
    %697 = vmatprep.subr.mxu0 0.0
    %698 = vmatpush1.msra.mxu0 0.0
    %699 = vmatprep.subr.mxu0 0.0
    %700 = vmatpush1.msra.mxu0 0.0
    %701 = vmatprep.subr.mxu0 0.0
    %702 = vmatpush1.msra.mxu0 0.0
    %703 = vmatprep.subr.mxu0 0.0
    %704 = vmatpush1.msra.mxu0 0.0
    %705 = vmatprep.subr.mxu0 0.0
    %706 = vmatpush1.msra.mxu0 0.0
    %707 = vmatprep.subr.mxu0 0.0
    %708 = vmatpush1.msra.mxu0 0.0
    %709 = vmatprep.subr.mxu0 0.0
    %710 = vmatpush1.msra.mxu0 0.0
    %711 = vmatprep.subr.mxu0 0.0
    %712 = vmatpush1.msra.mxu0 0.0
    %713 = vmatprep.subr.mxu0 0.0
    %714 = vmatpush1.msra.mxu0 0.0
    %715 = vmatprep.subr.mxu0 0.0
    %716 = vmatpush1.msra.mxu0 0.0
    %717 = vmatprep.subr.mxu0 0.0
    %718 = vmatpush1.msra.mxu0 0.0
    %719 = vmatprep.subr.mxu0 0.0
    %720 = vmatpush1.msra.mxu0 0.0
    %721 = vmatprep.subr.mxu0 0.0
    %722 = vmatpush1.msra.mxu0 0.0
    %723 = vmatprep.subr.mxu0 0.0
    %724 = vmatpush1.msra.mxu0 0.0
    %725 = vmatprep.subr.mxu0 0.0
    %726 = vmatpush1.msra.mxu0 0.0
    %727 = vmatprep.subr.mxu0 0.0
    %728 = vmatpush1.msra.mxu0 0.0
    %729 = vmatprep.subr.mxu0 0.0
    %730 = vmatpush1.msra.mxu0 0.0
    %731 = vmatprep.subr.mxu0 0.0
    %732 = vmatpush1.msra.mxu0 0.0
    %733 = vmatprep.subr.mxu0 0.0
    %734 = vmatpush1.msra.mxu0 0.0
    %735 = vmatprep.subr.mxu0 0.0
    %736 = vmatpush1.msra.mxu0 0.0
    %737 = vmatprep.subr.mxu0 0.0
    %738 = vmatpush1.msra.mxu0 0.0
    %739 = vmatprep.mubr.f32.mxu0 0.0
    %740 = vmatmul.mubr.f32.gmra.mrb[0].mxu0 %v602
    %v741 = vpop.f32.mrb[0].mxu0
    %v742 = vadd.f32 0.0, %v741
    %v743 = vpop.f32.mrb[0].mxu0
    %v744 = vadd.f32 0.0, %v743
    %745 = vdwg.mxu0
    %746 = vmatprep.subr.mxu0 0.0
    %747 = vmatpush1.msra.mxu0 %v585
    %748 = vmatprep.subr.mxu0 0.0
    %749 = vmatpush1.msra.mxu0 %v590
    %750 = vmatprep.subr.mxu0 0.0
    %751 = vmatpush1.msra.mxu0 %v595
    %752 = vmatprep.subr.mxu0 0.0
    %753 = vmatpush1.msra.mxu0 %v600
    %754 = vmatprep.subr.mxu0 0.0
    %755 = vmatpush1.msra.mxu0 0.0
    %756 = vmatprep.subr.mxu0 0.0
    %757 = vmatpush1.msra.mxu0 0.0
    %758 = vmatprep.subr.mxu0 0.0
    %759 = vmatpush1.msra.mxu0 0.0
    %760 = vmatprep.subr.mxu0 0.0
    %761 = vmatpush1.msra.mxu0 0.0
    %762 = vmatprep.subr.mxu0 0.0
    %763 = vmatpush1.msra.mxu0 0.0
    %764 = vmatprep.subr.mxu0 0.0
    %765 = vmatpush1.msra.mxu0 0.0
    %766 = vmatprep.subr.mxu0 0.0
    %767 = vmatpush1.msra.mxu0 0.0
    %768 = vmatprep.subr.mxu0 0.0
    %769 = vmatpush1.msra.mxu0 0.0
    %770 = vmatprep.subr.mxu0 0.0
    %771 = vmatpush1.msra.mxu0 0.0
    %772 = vmatprep.subr.mxu0 0.0
    %773 = vmatpush1.msra.mxu0 0.0
    %774 = vmatprep.subr.mxu0 0.0
    %775 = vmatpush1.msra.mxu0 0.0
    %776 = vmatprep.subr.mxu0 0.0
    %777 = vmatpush1.msra.mxu0 0.0
    %778 = vmatprep.subr.mxu0 0.0
    %779 = vmatpush1.msra.mxu0 0.0
    %780 = vmatprep.subr.mxu0 0.0
    %781 = vmatpush1.msra.mxu0 0.0
    %782 = vmatprep.subr.mxu0 0.0
    %783 = vmatpush1.msra.mxu0 0.0
    %784 = vmatprep.subr.mxu0 0.0
    %785 = vmatpush1.msra.mxu0 0.0
    %786 = vmatprep.subr.mxu0 0.0
    %787 = vmatpush1.msra.mxu0 0.0
    %788 = vmatprep.subr.mxu0 0.0
    %789 = vmatpush1.msra.mxu0 0.0
    %790 = vmatprep.subr.mxu0 0.0
    %791 = vmatpush1.msra.mxu0 0.0
    %792 = vmatprep.subr.mxu0 0.0
    %793 = vmatpush1.msra.mxu0 0.0
    %794 = vmatprep.subr.mxu0 0.0
    %795 = vmatpush1.msra.mxu0 0.0
    %796 = vmatprep.subr.mxu0 0.0
    %797 = vmatpush1.msra.mxu0 0.0
    %798 = vmatprep.subr.mxu0 0.0
    %799 = vmatpush1.msra.mxu0 0.0
    %800 = vmatprep.subr.mxu0 0.0
    %801 = vmatpush1.msra.mxu0 0.0
    %802 = vmatprep.subr.mxu0 0.0
    %803 = vmatpush1.msra.mxu0 0.0
    %804 = vmatprep.subr.mxu0 0.0
    %805 = vmatpush1.msra.mxu0 0.0
    %806 = vmatprep.subr.mxu0 0.0
    %807 = vmatpush1.msra.mxu0 0.0
    %808 = vmatprep.subr.mxu0 0.0
    %809 = vmatpush1.msra.mxu0 0.0
    %810 = vmatprep.mubr.f32.mxu0 0.0
    %811 = vmatmul.mubr.f32.gmra.mrb[0].mxu0 %v602
    %v812 = vpop.f32.mrb[0].mxu0
    %v813 = vadd.f32 0.0, %v812
    %v814 = vpop.f32.mrb[0].mxu0
    %815 = vdwg.mxu0
    %v816 = vadd.f32 %v435, %v671
    %v817 = vadd.f32 %v437, %v673
    %v818 = vadd.f32 %v506, %v742
    %v819 = vadd.f32 %v508, %v744
    %v820 = vadd.f32 %v577, %v813
    %v821 = vld [vmem:[%s3] sm:$0xff]
    %v822 = vld [vmem:[#allocation8] sm:$0xff]
    %v823 = vld [vmem:[#allocation8 + $0x8] sm:$0xff]
    %v824 = vld [vmem:[#allocation8 + $0x10] sm:$0xff]
    %v825 = vld [vmem:[#allocation8 + $0x18] sm:$0xff]
    %v826 = vld [vmem:[#allocation8 + $0x20] sm:$0xff]
    %v827 = vld [vmem:[#allocation8 + $0x28] sm:$0xff]
    %v828 = vld [vmem:[#allocation8 + $0x30] sm:$0xff]
    %v829 = vld [vmem:[#allocation8 + $0x38] sm:$0xff]
    %v830 = vld [vmem:[#allocation8 + $0x40] sm:$0xff]
    %v831 = vld [vmem:[#allocation8 + $0x48] sm:$0xff]
    %v832 = vld [vmem:[#allocation8 + $0x50] sm:$0xff]
    %v833 = vld [vmem:[#allocation8 + $0x58] sm:$0xff]
    %v834 = vld [vmem:[#allocation8 + $0x60] sm:$0xff]
    %v835 = vld [vmem:[#allocation8 + $0x68] sm:$0xff]
    %v836 = vld [vmem:[#allocation8 + $0x70] sm:$0xff]
    %v837 = vld [vmem:[#allocation8 + $0x78] sm:$0xff]
    %v838 = vld [vmem:[#allocation8 + $0x80] sm:$0xff]
    %v839 = vld [vmem:[#allocation8 + $0x88] sm:$0xff]
    %v840 = vld [vmem:[#allocation8 + $0x90] sm:$0xff]
    %v841 = vld [vmem:[#allocation8 + $0x98] sm:$0xff]
    %v843 = vsel %vm149, %v821, 0
    %845 = vmatprep.subr.mxu0 %v823
    %846 = vmatpush1.msra.mxu0 %v822
    %847 = vmatprep.subr.mxu0 %v828
    %848 = vmatpush1.msra.mxu0 %v827
    %849 = vmatprep.subr.mxu0 %v833
    %850 = vmatpush1.msra.mxu0 %v832
    %851 = vmatprep.subr.mxu0 %v838
    %852 = vmatpush1.msra.mxu0 %v837
    %853 = vmatprep.subr.mxu0 0.0
    %854 = vmatpush1.msra.mxu0 0.0
    %855 = vmatprep.subr.mxu0 0.0
    %856 = vmatpush1.msra.mxu0 0.0
    %857 = vmatprep.subr.mxu0 0.0
    %858 = vmatpush1.msra.mxu0 0.0
    %859 = vmatprep.subr.mxu0 0.0
    %860 = vmatpush1.msra.mxu0 0.0
    %861 = vmatprep.subr.mxu0 0.0
    %862 = vmatpush1.msra.mxu0 0.0
    %863 = vmatprep.subr.mxu0 0.0
    %864 = vmatpush1.msra.mxu0 0.0
    %865 = vmatprep.subr.mxu0 0.0
    %866 = vmatpush1.msra.mxu0 0.0
    %867 = vmatprep.subr.mxu0 0.0
    %868 = vmatpush1.msra.mxu0 0.0
    %869 = vmatprep.subr.mxu0 0.0
    %870 = vmatpush1.msra.mxu0 0.0
    %871 = vmatprep.subr.mxu0 0.0
    %872 = vmatpush1.msra.mxu0 0.0
    %873 = vmatprep.subr.mxu0 0.0
    %874 = vmatpush1.msra.mxu0 0.0
    %875 = vmatprep.subr.mxu0 0.0
    %876 = vmatpush1.msra.mxu0 0.0
    %877 = vmatprep.subr.mxu0 0.0
    %878 = vmatpush1.msra.mxu0 0.0
    %879 = vmatprep.subr.mxu0 0.0
    %880 = vmatpush1.msra.mxu0 0.0
    %881 = vmatprep.subr.mxu0 0.0
    %882 = vmatpush1.msra.mxu0 0.0
    %883 = vmatprep.subr.mxu0 0.0
    %884 = vmatpush1.msra.mxu0 0.0
    %885 = vmatprep.subr.mxu0 0.0
    %886 = vmatpush1.msra.mxu0 0.0
    %887 = vmatprep.subr.mxu0 0.0
    %888 = vmatpush1.msra.mxu0 0.0
    %889 = vmatprep.subr.mxu0 0.0
    %890 = vmatpush1.msra.mxu0 0.0
    %891 = vmatprep.subr.mxu0 0.0
    %892 = vmatpush1.msra.mxu0 0.0
    %893 = vmatprep.subr.mxu0 0.0
    %894 = vmatpush1.msra.mxu0 0.0
    %895 = vmatprep.subr.mxu0 0.0
    %896 = vmatpush1.msra.mxu0 0.0
    %897 = vmatprep.subr.mxu0 0.0
    %898 = vmatpush1.msra.mxu0 0.0
    %899 = vmatprep.subr.mxu0 0.0
    %900 = vmatpush1.msra.mxu0 0.0
    %901 = vmatprep.subr.mxu0 0.0
    %902 = vmatpush1.msra.mxu0 0.0
    %903 = vmatprep.subr.mxu0 0.0
    %904 = vmatpush1.msra.mxu0 0.0
    %905 = vmatprep.subr.mxu0 0.0
    %906 = vmatpush1.msra.mxu0 0.0
    %907 = vmatprep.subr.mxu0 0.0
    %908 = vmatpush1.msra.mxu0 0.0
    %909 = vmatprep.mubr.f32.mxu0 0.0
    %910 = vmatmul.mubr.f32.gmra.mrb[0].mxu0 %v843
    %v911 = vpop.f32.mrb[0].mxu0
    %v912 = vadd.f32 0.0, %v911
    %v913 = vpop.f32.mrb[0].mxu0
    %v914 = vadd.f32 0.0, %v913
    %915 = vdwg.mxu0
    %916 = vmatprep.subr.mxu0 %v825
    %917 = vmatpush1.msra.mxu0 %v824
    %918 = vmatprep.subr.mxu0 %v830
    %919 = vmatpush1.msra.mxu0 %v829
    %920 = vmatprep.subr.mxu0 %v835
    %921 = vmatpush1.msra.mxu0 %v834
    %922 = vmatprep.subr.mxu0 %v840
    %923 = vmatpush1.msra.mxu0 %v839
    %924 = vmatprep.subr.mxu0 0.0
    %925 = vmatpush1.msra.mxu0 0.0
    %926 = vmatprep.subr.mxu0 0.0
    %927 = vmatpush1.msra.mxu0 0.0
    %928 = vmatprep.subr.mxu0 0.0
    %929 = vmatpush1.msra.mxu0 0.0
    %930 = vmatprep.subr.mxu0 0.0
    %931 = vmatpush1.msra.mxu0 0.0
    %932 = vmatprep.subr.mxu0 0.0
    %933 = vmatpush1.msra.mxu0 0.0
    %934 = vmatprep.subr.mxu0 0.0
    %935 = vmatpush1.msra.mxu0 0.0
    %936 = vmatprep.subr.mxu0 0.0
    %937 = vmatpush1.msra.mxu0 0.0
    %938 = vmatprep.subr.mxu0 0.0
    %939 = vmatpush1.msra.mxu0 0.0
    %940 = vmatprep.subr.mxu0 0.0
    %941 = vmatpush1.msra.mxu0 0.0
    %942 = vmatprep.subr.mxu0 0.0
    %943 = vmatpush1.msra.mxu0 0.0
    %944 = vmatprep.subr.mxu0 0.0
    %945 = vmatpush1.msra.mxu0 0.0
    %946 = vmatprep.subr.mxu0 0.0
    %947 = vmatpush1.msra.mxu0 0.0
    %948 = vmatprep.subr.mxu0 0.0
    %949 = vmatpush1.msra.mxu0 0.0
    %950 = vmatprep.subr.mxu0 0.0
    %951 = vmatpush1.msra.mxu0 0.0
    %952 = vmatprep.subr.mxu0 0.0
    %953 = vmatpush1.msra.mxu0 0.0
    %954 = vmatprep.subr.mxu0 0.0
    %955 = vmatpush1.msra.mxu0 0.0
    %956 = vmatprep.subr.mxu0 0.0
    %957 = vmatpush1.msra.mxu0 0.0
    %958 = vmatprep.subr.mxu0 0.0
    %959 = vmatpush1.msra.mxu0 0.0
    %960 = vmatprep.subr.mxu0 0.0
    %961 = vmatpush1.msra.mxu0 0.0
    %962 = vmatprep.subr.mxu0 0.0
    %963 = vmatpush1.msra.mxu0 0.0
    %964 = vmatprep.subr.mxu0 0.0
    %965 = vmatpush1.msra.mxu0 0.0
    %966 = vmatprep.subr.mxu0 0.0
    %967 = vmatpush1.msra.mxu0 0.0
    %968 = vmatprep.subr.mxu0 0.0
    %969 = vmatpush1.msra.mxu0 0.0
    %970 = vmatprep.subr.mxu0 0.0
    %971 = vmatpush1.msra.mxu0 0.0
    %972 = vmatprep.subr.mxu0 0.0
    %973 = vmatpush1.msra.mxu0 0.0
    %974 = vmatprep.subr.mxu0 0.0
    %975 = vmatpush1.msra.mxu0 0.0
    %976 = vmatprep.subr.mxu0 0.0
    %977 = vmatpush1.msra.mxu0 0.0
    %978 = vmatprep.subr.mxu0 0.0
    %979 = vmatpush1.msra.mxu0 0.0
    %980 = vmatprep.mubr.f32.mxu0 0.0
    %981 = vmatmul.mubr.f32.gmra.mrb[0].mxu0 %v843
    %v982 = vpop.f32.mrb[0].mxu0
    %v983 = vadd.f32 0.0, %v982
    %v984 = vpop.f32.mrb[0].mxu0
    %v985 = vadd.f32 0.0, %v984
    %986 = vdwg.mxu0
    %987 = vmatprep.subr.mxu0 0.0
    %988 = vmatpush1.msra.mxu0 %v826
    %989 = vmatprep.subr.mxu0 0.0
    %990 = vmatpush1.msra.mxu0 %v831
    %991 = vmatprep.subr.mxu0 0.0
    %992 = vmatpush1.msra.mxu0 %v836
    %993 = vmatprep.subr.mxu0 0.0
    %994 = vmatpush1.msra.mxu0 %v841
    %995 = vmatprep.subr.mxu0 0.0
    %996 = vmatpush1.msra.mxu0 0.0
    %997 = vmatprep.subr.mxu0 0.0
    %998 = vmatpush1.msra.mxu0 0.0
    %999 = vmatprep.subr.mxu0 0.0
    %1000 = vmatpush1.msra.mxu0 0.0
    %1001 = vmatprep.subr.mxu0 0.0
    %1002 = vmatpush1.msra.mxu0 0.0
    %1003 = vmatprep.subr.mxu0 0.0
    %1004 = vmatpush1.msra.mxu0 0.0
    %1005 = vmatprep.subr.mxu0 0.0
    %1006 = vmatpush1.msra.mxu0 0.0
    %1007 = vmatprep.subr.mxu0 0.0
    %1008 = vmatpush1.msra.mxu0 0.0
    %1009 = vmatprep.subr.mxu0 0.0
    %1010 = vmatpush1.msra.mxu0 0.0
    %1011 = vmatprep.subr.mxu0 0.0
    %1012 = vmatpush1.msra.mxu0 0.0
    %1013 = vmatprep.subr.mxu0 0.0
    %1014 = vmatpush1.msra.mxu0 0.0
    %1015 = vmatprep.subr.mxu0 0.0
    %1016 = vmatpush1.msra.mxu0 0.0
    %1017 = vmatprep.subr.mxu0 0.0
    %1018 = vmatpush1.msra.mxu0 0.0
    %1019 = vmatprep.subr.mxu0 0.0
    %1020 = vmatpush1.msra.mxu0 0.0
    %1021 = vmatprep.subr.mxu0 0.0
    %1022 = vmatpush1.msra.mxu0 0.0
    %1023 = vmatprep.subr.mxu0 0.0
    %1024 = vmatpush1.msra.mxu0 0.0
    %1025 = vmatprep.subr.mxu0 0.0
    %1026 = vmatpush1.msra.mxu0 0.0
    %1027 = vmatprep.subr.mxu0 0.0
    %1028 = vmatpush1.msra.mxu0 0.0
    %1029 = vmatprep.subr.mxu0 0.0
    %1030 = vmatpush1.msra.mxu0 0.0
    %1031 = vmatprep.subr.mxu0 0.0
    %1032 = vmatpush1.msra.mxu0 0.0
    %1033 = vmatprep.subr.mxu0 0.0
    %1034 = vmatpush1.msra.mxu0 0.0
    %1035 = vmatprep.subr.mxu0 0.0
    %1036 = vmatpush1.msra.mxu0 0.0
    %1037 = vmatprep.subr.mxu0 0.0
    %1038 = vmatpush1.msra.mxu0 0.0
    %1039 = vmatprep.subr.mxu0 0.0
    %1040 = vmatpush1.msra.mxu0 0.0
    %1041 = vmatprep.subr.mxu0 0.0
    %1042 = vmatpush1.msra.mxu0 0.0
    %1043 = vmatprep.subr.mxu0 0.0
    %1044 = vmatpush1.msra.mxu0 0.0
    %1045 = vmatprep.subr.mxu0 0.0
    %1046 = vmatpush1.msra.mxu0 0.0
    %1047 = vmatprep.subr.mxu0 0.0
    %1048 = vmatpush1.msra.mxu0 0.0
    %1049 = vmatprep.subr.mxu0 0.0
    %1050 = vmatpush1.msra.mxu0 0.0
    %1051 = vmatprep.mubr.f32.mxu0 0.0
    %1052 = vmatmul.mubr.f32.gmra.mrb[0].mxu0 %v843
    %v1053 = vpop.f32.mrb[0].mxu0
    %v1054 = vadd.f32 0.0, %v1053
    %v1055 = vpop.f32.mrb[0].mxu0
    %1056 = vdwg.mxu0
    %v1057 = vadd.f32 %v816, %v912
    %v1058 = vadd.f32 %v817, %v914
    %v1059 = vadd.f32 %v818, %v983
    %v1060 = vadd.f32 %v819, %v985
    %v1061 = vadd.f32 %v820, %v1054
    %v1062 = vld [vmem:[#allocation10] sm:$0x1f]
    %v1064 = vlaneseq
    %v1065 = vshrl.u32 %v1064, 7
    %v1066 = vsub.s32 0, %v1065
    %v1067 = vrot.slane %v1062, %v1066
    %v1068 = vlaneseq
    %v1069 = vshrl.u32 %v1068, 7
    %v1070 = vsub.s32 1, %v1069
    %v1071 = vrot.slane %v1062, %v1070
    %v1072 = vlaneseq
    %v1073 = vshrl.u32 %v1072, 7
    %v1074 = vsub.s32 2, %v1073
    %v1075 = vrot.slane %v1062, %v1074
    %v1076 = vlaneseq
    %v1077 = vshrl.u32 %v1076, 7
    %v1078 = vsub.s32 3, %v1077
    %v1079 = vrot.slane %v1062, %v1078
    %v1080 = vlaneseq
    %v1081 = vshrl.u32 %v1080, 7
    %v1082 = vsub.s32 4, %v1081
    %v1083 = vrot.slane %v1062, %v1082
    %v1089 = vadd.f32 %v1057, %v1067
    %v1090 = vadd.f32 %v1058, %v1071
    %v1091 = vadd.f32 %v1059, %v1075
    %v1092 = vadd.f32 %v1060, %v1079
    %v1093 = vadd.f32 %v1061, %v1083
    %v1094 = vmul.f32 %v1089, 0.5
    %v1095 = vtanh.pop %v1094
    %v1096 = vmul.f32 %v1095, 0.5
    %v1097 = vadd.f32 %v1096, 0.5
    %v1098 = vtanh.pop %v1090
    %v1099 = vmul.f32 %v1091, 0.5
    %v1100 = vtanh.pop %v1099
    %v1101 = vmul.f32 %v1100, 0.5
    %v1102 = vadd.f32 %v1101, 0.5
    %v1103 = vmul.f32 %v1092, 0.5
    %v1104 = vtanh.pop %v1103
    %v1105 = vmul.f32 %v1104, 0.5
    %v1106 = vadd.f32 %v1105, 0.5
    %v1107 = vmul.f32 %v1093, 0.5
    %v1108 = vtanh.pop %v1107
    %v1109 = vmul.f32 %v1108, 0.5
    %v1110 = vadd.f32 %v1109, 0.5
    %v1111 = vld [vmem:[%s4] sm:$0xff]
    %v1112 = vld [vmem:[%s5] sm:$0xff]
    %v1113 = vmul.f32 %v1106, %v1111
    %v1114 = vmul.f32 %v1110, %v1112
    %v1115 = vadd.f32 %v1113, %v1114
    %v1116 = vmul.f32 %v1097, %v1098
    %v1117 = vadd.f32 %v1115, %v1116
    %v1118 = vtanh.pop %v1117
    %v1119 = vmul.f32 %v1102, %v1118
    %1120 = vst [vmem:[#allocation11] sm:$0xff] %v1117
    %1121 = vst [vmem:[%s11] sm:$0xff] %v1119
    // Predicated region
    $region66: #{mdlstm_cell_forward.1} parent=1 // pred_check
      _
    $region67: #{mdlstm_cell_forward.1} parent=1 // pred_check_branch
      %1123 = sbr.rel (0) target = $region69
    $region68: #{mdlstm_cell_forward.1} parent=1 // pred_region
      _
    $region69: #{mdlstm_cell_forward.1} parent=1 // pred_fallthru
      _
    // Predicated region
    $region70: #{mdlstm_cell_forward.1} parent=1 // pred_check
      _
    $region71: #{mdlstm_cell_forward.1} parent=1 // pred_check_branch
      %1125 = sbr.rel (0) target = $region73
    $region72: #{mdlstm_cell_forward.1} parent=1 // pred_region
      %s1127 = ssub.s32 128, 128
      %1128 = vsyncadd [#allocation4], %s1127
      %s1130 = sshll.u32 [#allocation11], 4
      %s1131 = int_to_ptr.vmem [resolvable:$true] %s1130
      %1133 = dma.vmem_to_hbm [thread:$0]  %s1131, 128, %s12, [#allocation4]
    $region73: #{mdlstm_cell_forward.1} parent=1 // pred_fallthru
      _
    // Predicated region
    $region74: #{mdlstm_cell_forward.1} parent=1 // pred_check
      _
    $region75: #{mdlstm_cell_forward.1} parent=1 // pred_check_branch
      %1135 = sbr.rel (0) target = $region77
    $region76: #{mdlstm_cell_forward.1} parent=1 // pred_region
      _
    $region77: #{mdlstm_cell_forward.1} parent=1 // pred_fallthru
      _
    // Predicated region
    $region78: #{mdlstm_cell_forward.1} parent=1 // pred_check
      _
    $region79: #{mdlstm_cell_forward.1} parent=1 // pred_check_branch
      %1137 = sbr.rel (0) target = $region81
    $region80: #{mdlstm_cell_forward.1} parent=1 // pred_region
      %1138 = dma.done [#allocation4], 128
    $region81: #{mdlstm_cell_forward.1} parent=1 // pred_fallthru
      _
    %1139 = vsyncpa [#allocation3], 1
    %1140 = vsyncpa [#allocation6], 1
    %1141 = vsyncpa [#allocation9], 1
    %1142 = vsyncpa [#allocation4], 1

</llo_original>
